<compile_context>
chip_gen: v6e
topology: v6e:2x2x1
jax: 0.10.0
libtpu: 0.0.40
codegen_flags: <defaults>
</compile_context>

<pallas_src>
import functools

import jax
import jax.numpy as jnp
from jax.experimental import pallas as pl
from jax.experimental.pallas import tpu as pltpu


def _lstm_kernel(x_ref, wih_ref, whh_ref, b_ref, wfc_ref, bfc_ref,
                 out_ref, gx_sc, h_sc, c_sc, *,
                 seq_len, chunk_t, batch_pad, hidden_size, unroll):
    H = hidden_size
    B = batch_pad
    k = pl.program_id(0)
    last = pl.num_programs(0) - 1

    # h/c live in VMEM scratch across time-chunks (grid iterations).
    @pl.when(k == 0)
    def _():
        h_sc[...] = jnp.zeros_like(h_sc)
        c_sc[...] = jnp.zeros_like(c_sc)

    # (1) Input projection for every timestep of this chunk in ONE GEMM
    #     (bf16 operands, f32 accumulation), off the serial path:
    #     gx[t*B:(t+1)*B, :] = x_t @ W_ih^T + (b_ih + b_hh)
    gx_sc[...] = (jnp.dot(x_ref[...], wih_ref[...],
                          preferred_element_type=jnp.float32)
                  + b_ref[...])

    def sigmoid(z):
        # Exact identity, single EUP op on the dependent path.
        return 0.5 * jnp.tanh(0.5 * z) + 0.5

    mm_dtype = whh_ref.dtype
    needs_mask = (seq_len % chunk_t) != 0

    # (2) Serial recurrence; h/c are loop-carried values (stay in vregs).
    def step(t, carry):
        h, c = carry
        base = pl.multiple_of(t * B, B)
        g = gx_sc[pl.ds(base, B), :] + jnp.dot(
            h.astype(mm_dtype), whh_ref[...],
            preferred_element_type=jnp.float32)                   # (B, 4H)
        # PyTorch gate order: i, f, g, o.  One EUP launch over the [i|f] slab.
        if_g = sigmoid(g[:, :2 * H])
        i_g = if_g[:, :H]
        f_g = if_g[:, H:]
        g_g = jnp.tanh(g[:, 2 * H:3 * H])
        o_g = sigmoid(g[:, 3 * H:])
        c_new = f_g * c + i_g * g_g
        h_new = o_g * jnp.tanh(c_new)
        if needs_mask:
            valid = (k * chunk_t + t) < seq_len
            h_new = jnp.where(valid, h_new, h)
            c_new = jnp.where(valid, c_new, c)
        return (h_new, c_new)

    h_fin, c_fin = jax.lax.fori_loop(0, chunk_t, step,
                                     (h_sc[...], c_sc[...]), unroll=unroll)
    h_sc[...] = h_fin
    c_sc[...] = c_fin

    # (3) Final Linear on the last hidden state (kept f32; tiny matmul).
    @pl.when(k == last)
    def _():
        out_ref[...] = (jnp.dot(h_fin, wfc_ref[...],
                                preferred_element_type=jnp.float32)
                        + bfc_ref[...])


def exercise_lstm_forward(x, params, *, hidden_size=128, num_classes=2,
                          matmul_dtype=jnp.bfloat16, chunk_t_max=128):
    """x: (B, T, input_size) float32.  Returns (B, num_classes) float32."""
    B, T, I = x.shape
    H = hidden_size
    bf16 = jnp.dtype(matmul_dtype) == jnp.dtype(jnp.bfloat16)

    # Pad batch to sublane packing of the matmul dtype (16 for bf16, 8 for
    # f32); feature / class dims to the 128-lane width.  Zero padding does not
    # change the math (padded x rows/cols hit zero weight rows; padded fc
    # columns and padded batch rows are sliced off on return).
    sub = 16 if bf16 else 8
    B_pad = ((B + sub - 1) // sub) * sub
    I_pad = ((I + 127) // 128) * 128
    C_pad = ((num_classes + 127) // 128) * 128

    # Chunk the time axis over a sequential grid: bounds VMEM (v7x-safe) and
    # overlaps next-chunk x streaming with the current chunk's recurrence.
    chunk_T = min(T, chunk_t_max)
    num_chunks = (T + chunk_T - 1) // chunk_T
    T_pad = num_chunks * chunk_T

    w_ih, w_hh, b_ih, b_hh, w_fc, b_fc = params

    # Layout plumbing: time-major, padded, flattened to a lane-dense 2-D GEMM
    # operand (T_pad*B_pad, I_pad) in the matmul dtype.
    x_p = jnp.pad(x.astype(jnp.float32),
                  ((0, B_pad - B), (0, 0), (0, I_pad - I)))     # (B_pad,T,I_pad)
    x_tm = jnp.transpose(x_p, (1, 0, 2))                        # (T,B_pad,I_pad)
    x_tm = jnp.pad(x_tm, ((0, T_pad - T), (0, 0), (0, 0)))
    x2d = x_tm.reshape(T_pad * B_pad, I_pad).astype(matmul_dtype)

    wih_t = jnp.pad(w_ih.T, ((0, I_pad - I), (0, 0))).astype(matmul_dtype)
    whh_t = w_hh.T.astype(matmul_dtype)                         # (H, 4H)
    b_all = (b_ih + b_hh).reshape(1, 4 * H).astype(jnp.float32)
    wfc_t = jnp.pad(w_fc.T,
                    ((0, 0), (0, C_pad - num_classes))).astype(jnp.float32)
    bfc_p = jnp.pad(b_fc, ((0, C_pad - num_classes),)
                    ).reshape(1, C_pad).astype(jnp.float32)

    # Full unroll for short chunks, partial unroll (8) for long ones.
    unroll = chunk_T if chunk_T <= 8 else 8

    kernel = functools.partial(
        _lstm_kernel, seq_len=T, chunk_t=chunk_T, batch_pad=B_pad,
        hidden_size=H, unroll=unroll)

    out_padded = pl.pallas_call(
        kernel,
        out_shape=jax.ShapeDtypeStruct((B_pad, C_pad), jnp.float32),
        grid_spec=pltpu.PrefetchScalarGridSpec(
            num_scalar_prefetch=0,
            grid=(num_chunks,),
            in_specs=[
                # x: one time-chunk per grid step (auto double-buffered).
                pl.BlockSpec((chunk_T * B_pad, I_pad), lambda k: (k, 0)),
                # Weights / biases: constant block index => DMA'd once.
                pl.BlockSpec((I_pad, 4 * H), lambda k: (0, 0)),
                pl.BlockSpec((H, 4 * H), lambda k: (0, 0)),
                pl.BlockSpec((1, 4 * H), lambda k: (0, 0)),
                pl.BlockSpec((H, C_pad), lambda k: (0, 0)),
                pl.BlockSpec((1, C_pad), lambda k: (0, 0)),
            ],
            out_specs=pl.BlockSpec((B_pad, C_pad), lambda k: (0, 0)),
            scratch_shapes=[
                pltpu.VMEM((chunk_T * B_pad, 4 * H), jnp.float32),  # gx chunk
                pltpu.VMEM((B_pad, H), jnp.float32),                # h carry
                pltpu.VMEM((B_pad, H), jnp.float32),                # c carry
            ]),
        compiler_params=pltpu.CompilerParams(
            dimension_semantics=("arbitrary",),   # time chunks are sequential
            vmem_limit_bytes=32 * 1024 * 1024),
    )(x2d, wih_t, whh_t, b_all, wfc_t, bfc_p)

    return out_padded[:B, :num_classes]


def init_params(key, input_size, hidden_size, num_classes):
    """PyTorch-shaped params: W_ih (4H,I), W_hh (4H,H), b_ih/b_hh (4H,),
    W_fc (C,H), b_fc (C,).  Uniform(-1/sqrt(H), 1/sqrt(H))."""
    H = hidden_size
    k = 1.0 / jnp.sqrt(jnp.float32(H))
    keys = jax.random.split(key, 6)
    w_ih = jax.random.uniform(keys[0], (4 * H, input_size), jnp.float32, -k, k)
    w_hh = jax.random.uniform(keys[1], (4 * H, H), jnp.float32, -k, k)
    b_ih = jax.random.uniform(keys[2], (4 * H,), jnp.float32, -k, k)
    b_hh = jax.random.uniform(keys[3], (4 * H,), jnp.float32, -k, k)
    w_fc = jax.random.uniform(keys[4], (num_classes, H), jnp.float32, -k, k)
    b_fc = jax.random.uniform(keys[5], (num_classes,), jnp.float32, -k, k)
    return (w_ih, w_hh, b_ih, b_hh, w_fc, b_fc)


def _reference_forward(x, params, hidden_size, num_classes):
    """Pure-JAX f32 reference of the PyTorch forward, for correctness checks."""
    w_ih, w_hh, b_ih, b_hh, w_fc, b_fc = params
    B, T, _ = x.shape
    H = hidden_size
    h = jnp.zeros((B, H), jnp.float32)
    c = jnp.zeros((B, H), jnp.float32)

    def step(carry, x_t):
        h, c = carry
        gates = x_t @ w_ih.T + b_ih + h @ w_hh.T + b_hh
        i = jax.nn.sigmoid(gates[:, 0 * H:1 * H])
        f = jax.nn.sigmoid(gates[:, 1 * H:2 * H])
        g = jnp.tanh(gates[:, 2 * H:3 * H])
        o = jax.nn.sigmoid(gates[:, 3 * H:4 * H])
        c = f * c + i * g
        h = o * jnp.tanh(c)
        return (h, c), None

    (h, c), _ = jax.lax.scan(step, (h, c), jnp.transpose(x, (1, 0, 2)))
    return h @ w_fc.T + b_fc


if __name__ == "__main__":
    input_size, hidden_size, num_classes = 34, 128, 2
    B, T = 2, 8

    key = jax.random.PRNGKey(0)
    kx, kp = jax.random.split(key)
    x = jax.random.normal(kx, (B, T, input_size), jnp.float32)
    params = init_params(kp, input_size, hidden_size, num_classes)

    ref = _reference_forward(x, params, hidden_size, num_classes)

    # Exact-math path: f32 matmuls must match the PyTorch-style reference.
    out_f32 = exercise_lstm_forward(x, params, hidden_size=hidden_size,
                                    num_classes=num_classes,
                                    matmul_dtype=jnp.float32)
    out_f32 = jax.block_until_ready(out_f32)
    assert out_f32.shape == (B, num_classes)
    assert jnp.allclose(out_f32, ref, atol=1e-4, rtol=1e-4)

    # Default fast path: bf16 MXU operands with f32 accumulation.
    out = exercise_lstm_forward(x, params, hidden_size=hidden_size,
                                num_classes=num_classes)
    out = jax.block_until_ready(out)
    assert out.shape == (B, num_classes)
    assert jnp.allclose(out, ref, atol=1e-2, rtol=1e-2)

    print("KERNEL_OK")
</pallas_src>

<mosaic_0001>
module attributes {stable_mosaic.version = 11 : i64} {
  func.func @_lstm_kernel(%arg0: i32, %arg1: memref<64x128xf32, #tpu.memory_space<vmem>>, %arg2: memref<128x512xf32, #tpu.memory_space<vmem>>, %arg3: memref<128x512xf32, #tpu.memory_space<vmem>>, %arg4: memref<1x512xf32, #tpu.memory_space<vmem>>, %arg5: memref<128x128xf32, #tpu.memory_space<vmem>>, %arg6: memref<1x128xf32, #tpu.memory_space<vmem>>, %arg7: memref<8x128xf32, #tpu.memory_space<vmem>>, %arg8: memref<64x512xf32, #tpu.memory_space<vmem>>, %arg9: memref<8x128xf32, #tpu.memory_space<vmem>>, %arg10: memref<8x128xf32, #tpu.memory_space<vmem>>) attributes {dimension_semantics = [#tpu.dimension_semantics<arbitrary>], iteration_bounds = array<i64: 1>, scalar_prefetch = 0 : i64, scratch_operands = 3 : i64, tpu.core_type = #tpu.core_type<tc>, window_params = [{transform_indices = @transform_0, window_bounds = array<i64: 64, 128>}, {pipeline_mode = #tpu.pipeline_mode<synchronous>, transform_indices = @transform_1, window_bounds = array<i64: 128, 512>}, {pipeline_mode = #tpu.pipeline_mode<synchronous>, transform_indices = @transform_2, window_bounds = array<i64: 128, 512>}, {pipeline_mode = #tpu.pipeline_mode<synchronous>, transform_indices = @transform_3, window_bounds = array<i64: 1, 512>}, {pipeline_mode = #tpu.pipeline_mode<synchronous>, transform_indices = @transform_4, window_bounds = array<i64: 128, 128>}, {pipeline_mode = #tpu.pipeline_mode<synchronous>, transform_indices = @transform_5, window_bounds = array<i64: 1, 128>}, {pipeline_mode = #tpu.pipeline_mode<synchronous>, transform_indices = @transform_6, window_bounds = array<i64: 8, 128>}]} {
    %c0_i32 = arith.constant 0 : i32
    %0 = arith.cmpi eq, %arg0, %c0_i32 : i32
    %1 = arith.extui %0 : i1 to i32
    %c0_i32_0 = arith.constant 0 : i32
    %2 = arith.cmpi ne, %1, %c0_i32_0 : i32
    scf.if %2 {
      %cst_107 = arith.constant 0.000000e+00 : f32
      %273 = vector.broadcast %cst_107 : f32 to vector<8x128xf32>
      %c0_108 = arith.constant 0 : index
      %c0_109 = arith.constant 0 : index
      %274 = vector.load %arg9[%c0_108, %c0_109] : memref<8x128xf32, #tpu.memory_space<vmem>>, vector<8x128xf32>
      tpu.vector_store %arg9[%c0_108, %c0_109], %273 {strides = array<i32>} : memref<8x128xf32, #tpu.memory_space<vmem>>, vector<8x128xf32>,
      %cst_110 = arith.constant 0.000000e+00 : f32
      %275 = vector.broadcast %cst_110 : f32 to vector<8x128xf32>
      %c0_111 = arith.constant 0 : index
      %c0_112 = arith.constant 0 : index
      %276 = vector.load %arg10[%c0_111, %c0_112] : memref<8x128xf32, #tpu.memory_space<vmem>>, vector<8x128xf32>
      tpu.vector_store %arg10[%c0_111, %c0_112], %275 {strides = array<i32>} : memref<8x128xf32, #tpu.memory_space<vmem>>, vector<8x128xf32>,
    } else {
    }
    %c0 = arith.constant 0 : index
    %c0_1 = arith.constant 0 : index
    %3 = vector.load %arg1[%c0, %c0_1] : memref<64x128xf32, #tpu.memory_space<vmem>>, vector<64x128xf32>
    %c0_2 = arith.constant 0 : index
    %c0_3 = arith.constant 0 : index
    %4 = vector.load %arg2[%c0_2, %c0_3] : memref<128x512xf32, #tpu.memory_space<vmem>>, vector<128x512xf32>
    %cst = arith.constant dense<0.000000e+00> : vector<64x512xf32>
    %5 = tpu.matmul %3, %4, %cst {dimension_numbers = #tpu.dot_dimension_numbers<[1], [0], [0], [1], [0, 0, 1, 1], [], []>} : vector<64x128xf32>, vector<128x512xf32>, vector<64x512xf32> -> vector<64x512xf32>
    %c0_4 = arith.constant 0 : index
    %c0_5 = arith.constant 0 : index
    %6 = vector.load %arg4[%c0_4, %c0_5] : memref<1x512xf32, #tpu.memory_space<vmem>>, vector<1x512xf32>
    %7 = vector.broadcast %6 : vector<1x512xf32> to vector<64x512xf32>
    %8 = arith.addf %5, %7 : vector<64x512xf32>
    %c0_6 = arith.constant 0 : index
    %c0_7 = arith.constant 0 : index
    %9 = vector.load %arg8[%c0_6, %c0_7] : memref<64x512xf32, #tpu.memory_space<vmem>>, vector<64x512xf32>
    tpu.vector_store %arg8[%c0_6, %c0_7], %8 {strides = array<i32>} : memref<64x512xf32, #tpu.memory_space<vmem>>, vector<64x512xf32>,
    %c0_8 = arith.constant 0 : index
    %c0_9 = arith.constant 0 : index
    %10 = vector.load %arg9[%c0_8, %c0_9] : memref<8x128xf32, #tpu.memory_space<vmem>>, vector<8x128xf32>
    %c0_10 = arith.constant 0 : index
    %c0_11 = arith.constant 0 : index
    %11 = vector.load %arg10[%c0_10, %c0_11] : memref<8x128xf32, #tpu.memory_space<vmem>>, vector<8x128xf32>
    %c0_i32_12 = arith.constant 0 : i32
    %c8_i32 = arith.constant 8 : i32
    %12 = arith.muli %c0_i32_12, %c8_i32 : i32
    %13 = tpu.assume_multiple %12, 8 : i32
    %14 = arith.index_cast %13 : i32 to index
    %c0_13 = arith.constant 0 : index
    %15 = vector.load %arg8[%14, %c0_13] : memref<64x512xf32, #tpu.memory_space<vmem>>, vector<8x512xf32>
    %c0_14 = arith.constant 0 : index
    %c0_15 = arith.constant 0 : index
    %16 = vector.load %arg3[%c0_14, %c0_15] : memref<128x512xf32, #tpu.memory_space<vmem>>, vector<128x512xf32>
    %cst_16 = arith.constant dense<0.000000e+00> : vector<8x512xf32>
    %17 = tpu.matmul %10, %16, %cst_16 {dimension_numbers = #tpu.dot_dimension_numbers<[1], [0], [0], [1], [0, 0, 1, 1], [], []>} : vector<8x128xf32>, vector<128x512xf32>, vector<8x512xf32> -> vector<8x512xf32>
    %18 = arith.addf %15, %17 : vector<8x512xf32>
    %19 = vector.extract_strided_slice %18 {offsets = [0, 0], sizes = [8, 256], strides = [1, 1]} : vector<8x512xf32> to vector<8x256xf32>
    %cst_17 = arith.constant 5.000000e-01 : f32
    %20 = vector.broadcast %cst_17 : f32 to vector<8x256xf32>
    %21 = arith.mulf %20, %19 : vector<8x256xf32>
    %22 = math.tanh %21 : vector<8x256xf32>
    %cst_18 = arith.constant 5.000000e-01 : f32
    %23 = vector.broadcast %cst_18 : f32 to vector<8x256xf32>
    %24 = arith.mulf %23, %22 : vector<8x256xf32>
    %cst_19 = arith.constant 5.000000e-01 : f32
    %25 = vector.broadcast %cst_19 : f32 to vector<8x256xf32>
    %26 = arith.addf %24, %25 : vector<8x256xf32>
    %27 = vector.extract_strided_slice %26 {offsets = [0, 0], sizes = [8, 128], strides = [1, 1]} : vector<8x256xf32> to vector<8x128xf32>
    %28 = vector.extract_strided_slice %26 {offsets = [0, 128], sizes = [8, 128], strides = [1, 1]} : vector<8x256xf32> to vector<8x128xf32>
    %29 = vector.extract_strided_slice %18 {offsets = [0, 256], sizes = [8, 128], strides = [1, 1]} : vector<8x512xf32> to vector<8x128xf32>
    %30 = math.tanh %29 : vector<8x128xf32>
    %31 = vector.extract_strided_slice %18 {offsets = [0, 384], sizes = [8, 128], strides = [1, 1]} : vector<8x512xf32> to vector<8x128xf32>
    %cst_20 = arith.constant 5.000000e-01 : f32
    %32 = vector.broadcast %cst_20 : f32 to vector<8x128xf32>
    %33 = arith.mulf %32, %31 : vector<8x128xf32>
    %34 = math.tanh %33 : vector<8x128xf32>
    %cst_21 = arith.constant 5.000000e-01 : f32
    %35 = vector.broadcast %cst_21 : f32 to vector<8x128xf32>
    %36 = arith.mulf %35, %34 : vector<8x128xf32>
    %cst_22 = arith.constant 5.000000e-01 : f32
    %37 = vector.broadcast %cst_22 : f32 to vector<8x128xf32>
    %38 = arith.addf %36, %37 : vector<8x128xf32>
    %39 = arith.mulf %28, %11 : vector<8x128xf32>
    %40 = arith.mulf %27, %30 : vector<8x128xf32>
    %41 = arith.addf %39, %40 : vector<8x128xf32>
    %42 = math.tanh %41 : vector<8x128xf32>
    %43 = arith.mulf %38, %42 : vector<8x128xf32>
    %c1_i32 = arith.constant 1 : i32
    %c8_i32_23 = arith.constant 8 : i32
    %44 = arith.muli %c1_i32, %c8_i32_23 : i32
    %45 = tpu.assume_multiple %44, 8 : i32
    %46 = arith.index_cast %45 : i32 to index
    %c0_24 = arith.constant 0 : index
    %47 = vector.load %arg8[%46, %c0_24] : memref<64x512xf32, #tpu.memory_space<vmem>>, vector<8x512xf32>
    %c0_25 = arith.constant 0 : index
    %c0_26 = arith.constant 0 : index
    %48 = vector.load %arg3[%c0_25, %c0_26] : memref<128x512xf32, #tpu.memory_space<vmem>>, vector<128x512xf32>
    %cst_27 = arith.constant dense<0.000000e+00> : vector<8x512xf32>
    %49 = tpu.matmul %43, %48, %cst_27 {dimension_numbers = #tpu.dot_dimension_numbers<[1], [0], [0], [1], [0, 0, 1, 1], [], []>} : vector<8x128xf32>, vector<128x512xf32>, vector<8x512xf32> -> vector<8x512xf32>
    %50 = arith.addf %47, %49 : vector<8x512xf32>
    %51 = vector.extract_strided_slice %50 {offsets = [0, 0], sizes = [8, 256], strides = [1, 1]} : vector<8x512xf32> to vector<8x256xf32>
    %cst_28 = arith.constant 5.000000e-01 : f32
    %52 = vector.broadcast %cst_28 : f32 to vector<8x256xf32>
    %53 = arith.mulf %52, %51 : vector<8x256xf32>
    %54 = math.tanh %53 : vector<8x256xf32>
    %cst_29 = arith.constant 5.000000e-01 : f32
    %55 = vector.broadcast %cst_29 : f32 to vector<8x256xf32>
    %56 = arith.mulf %55, %54 : vector<8x256xf32>
    %cst_30 = arith.constant 5.000000e-01 : f32
    %57 = vector.broadcast %cst_30 : f32 to vector<8x256xf32>
    %58 = arith.addf %56, %57 : vector<8x256xf32>
    %59 = vector.extract_strided_slice %58 {offsets = [0, 0], sizes = [8, 128], strides = [1, 1]} : vector<8x256xf32> to vector<8x128xf32>
    %60 = vector.extract_strided_slice %58 {offsets = [0, 128], sizes = [8, 128], strides = [1, 1]} : vector<8x256xf32> to vector<8x128xf32>
    %61 = vector.extract_strided_slice %50 {offsets = [0, 256], sizes = [8, 128], strides = [1, 1]} : vector<8x512xf32> to vector<8x128xf32>
    %62 = math.tanh %61 : vector<8x128xf32>
    %63 = vector.extract_strided_slice %50 {offsets = [0, 384], sizes = [8, 128], strides = [1, 1]} : vector<8x512xf32> to vector<8x128xf32>
    %cst_31 = arith.constant 5.000000e-01 : f32
    %64 = vector.broadcast %cst_31 : f32 to vector<8x128xf32>
    %65 = arith.mulf %64, %63 : vector<8x128xf32>
    %66 = math.tanh %65 : vector<8x128xf32>
    %cst_32 = arith.constant 5.000000e-01 : f32
    %67 = vector.broadcast %cst_32 : f32 to vector<8x128xf32>
    %68 = arith.mulf %67, %66 : vector<8x128xf32>
    %cst_33 = arith.constant 5.000000e-01 : f32
    %69 = vector.broadcast %cst_33 : f32 to vector<8x128xf32>
    %70 = arith.addf %68, %69 : vector<8x128xf32>
    %71 = arith.mulf %60, %41 : vector<8x128xf32>
    %72 = arith.mulf %59, %62 : vector<8x128xf32>
    %73 = arith.addf %71, %72 : vector<8x128xf32>
    %74 = math.tanh %73 : vector<8x128xf32>
    %75 = arith.mulf %70, %74 : vector<8x128xf32>
    %c2_i32 = arith.constant 2 : i32
    %c8_i32_34 = arith.constant 8 : i32
    %76 = arith.muli %c2_i32, %c8_i32_34 : i32
    %77 = tpu.assume_multiple %76, 8 : i32
    %78 = arith.index_cast %77 : i32 to index
    %c0_35 = arith.constant 0 : index
    %79 = vector.load %arg8[%78, %c0_35] : memref<64x512xf32, #tpu.memory_space<vmem>>, vector<8x512xf32>
    %c0_36 = arith.constant 0 : index
    %c0_37 = arith.constant 0 : index
    %80 = vector.load %arg3[%c0_36, %c0_37] : memref<128x512xf32, #tpu.memory_space<vmem>>, vector<128x512xf32>
    %cst_38 = arith.constant dense<0.000000e+00> : vector<8x512xf32>
    %81 = tpu.matmul %75, %80, %cst_38 {dimension_numbers = #tpu.dot_dimension_numbers<[1], [0], [0], [1], [0, 0, 1, 1], [], []>} : vector<8x128xf32>, vector<128x512xf32>, vector<8x512xf32> -> vector<8x512xf32>
    %82 = arith.addf %79, %81 : vector<8x512xf32>
    %83 = vector.extract_strided_slice %82 {offsets = [0, 0], sizes = [8, 256], strides = [1, 1]} : vector<8x512xf32> to vector<8x256xf32>
    %cst_39 = arith.constant 5.000000e-01 : f32
    %84 = vector.broadcast %cst_39 : f32 to vector<8x256xf32>
    %85 = arith.mulf %84, %83 : vector<8x256xf32>
    %86 = math.tanh %85 : vector<8x256xf32>
    %cst_40 = arith.constant 5.000000e-01 : f32
    %87 = vector.broadcast %cst_40 : f32 to vector<8x256xf32>
    %88 = arith.mulf %87, %86 : vector<8x256xf32>
    %cst_41 = arith.constant 5.000000e-01 : f32
    %89 = vector.broadcast %cst_41 : f32 to vector<8x256xf32>
    %90 = arith.addf %88, %89 : vector<8x256xf32>
    %91 = vector.extract_strided_slice %90 {offsets = [0, 0], sizes = [8, 128], strides = [1, 1]} : vector<8x256xf32> to vector<8x128xf32>
    %92 = vector.extract_strided_slice %90 {offsets = [0, 128], sizes = [8, 128], strides = [1, 1]} : vector<8x256xf32> to vector<8x128xf32>
    %93 = vector.extract_strided_slice %82 {offsets = [0, 256], sizes = [8, 128], strides = [1, 1]} : vector<8x512xf32> to vector<8x128xf32>
    %94 = math.tanh %93 : vector<8x128xf32>
    %95 = vector.extract_strided_slice %82 {offsets = [0, 384], sizes = [8, 128], strides = [1, 1]} : vector<8x512xf32> to vector<8x128xf32>
    %cst_42 = arith.constant 5.000000e-01 : f32
    %96 = vector.broadcast %cst_42 : f32 to vector<8x128xf32>
    %97 = arith.mulf %96, %95 : vector<8x128xf32>
    %98 = math.tanh %97 : vector<8x128xf32>
    %cst_43 = arith.constant 5.000000e-01 : f32
    %99 = vector.broadcast %cst_43 : f32 to vector<8x128xf32>
    %100 = arith.mulf %99, %98 : vector<8x128xf32>
    %cst_44 = arith.constant 5.000000e-01 : f32
    %101 = vector.broadcast %cst_44 : f32 to vector<8x128xf32>
    %102 = arith.addf %100, %101 : vector<8x128xf32>
    %103 = arith.mulf %92, %73 : vector<8x128xf32>
    %104 = arith.mulf %91, %94 : vector<8x128xf32>
    %105 = arith.addf %103, %104 : vector<8x128xf32>
    %106 = math.tanh %105 : vector<8x128xf32>
    %107 = arith.mulf %102, %106 : vector<8x128xf32>
    %c3_i32 = arith.constant 3 : i32
    %c8_i32_45 = arith.constant 8 : i32
    %108 = arith.muli %c3_i32, %c8_i32_45 : i32
    %109 = tpu.assume_multiple %108, 8 : i32
    %110 = arith.index_cast %109 : i32 to index
    %c0_46 = arith.constant 0 : index
    %111 = vector.load %arg8[%110, %c0_46] : memref<64x512xf32, #tpu.memory_space<vmem>>, vector<8x512xf32>
    %c0_47 = arith.constant 0 : index
    %c0_48 = arith.constant 0 : index
    %112 = vector.load %arg3[%c0_47, %c0_48] : memref<128x512xf32, #tpu.memory_space<vmem>>, vector<128x512xf32>
    %cst_49 = arith.constant dense<0.000000e+00> : vector<8x512xf32>
    %113 = tpu.matmul %107, %112, %cst_49 {dimension_numbers = #tpu.dot_dimension_numbers<[1], [0], [0], [1], [0, 0, 1, 1], [], []>} : vector<8x128xf32>, vector<128x512xf32>, vector<8x512xf32> -> vector<8x512xf32>
    %114 = arith.addf %111, %113 : vector<8x512xf32>
    %115 = vector.extract_strided_slice %114 {offsets = [0, 0], sizes = [8, 256], strides = [1, 1]} : vector<8x512xf32> to vector<8x256xf32>
    %cst_50 = arith.constant 5.000000e-01 : f32
    %116 = vector.broadcast %cst_50 : f32 to vector<8x256xf32>
    %117 = arith.mulf %116, %115 : vector<8x256xf32>
    %118 = math.tanh %117 : vector<8x256xf32>
    %cst_51 = arith.constant 5.000000e-01 : f32
    %119 = vector.broadcast %cst_51 : f32 to vector<8x256xf32>
    %120 = arith.mulf %119, %118 : vector<8x256xf32>
    %cst_52 = arith.constant 5.000000e-01 : f32
    %121 = vector.broadcast %cst_52 : f32 to vector<8x256xf32>
    %122 = arith.addf %120, %121 : vector<8x256xf32>
    %123 = vector.extract_strided_slice %122 {offsets = [0, 0], sizes = [8, 128], strides = [1, 1]} : vector<8x256xf32> to vector<8x128xf32>
    %124 = vector.extract_strided_slice %122 {offsets = [0, 128], sizes = [8, 128], strides = [1, 1]} : vector<8x256xf32> to vector<8x128xf32>
    %125 = vector.extract_strided_slice %114 {offsets = [0, 256], sizes = [8, 128], strides = [1, 1]} : vector<8x512xf32> to vector<8x128xf32>
    %126 = math.tanh %125 : vector<8x128xf32>
    %127 = vector.extract_strided_slice %114 {offsets = [0, 384], sizes = [8, 128], strides = [1, 1]} : vector<8x512xf32> to vector<8x128xf32>
    %cst_53 = arith.constant 5.000000e-01 : f32
    %128 = vector.broadcast %cst_53 : f32 to vector<8x128xf32>
    %129 = arith.mulf %128, %127 : vector<8x128xf32>
    %130 = math.tanh %129 : vector<8x128xf32>
    %cst_54 = arith.constant 5.000000e-01 : f32
    %131 = vector.broadcast %cst_54 : f32 to vector<8x128xf32>
    %132 = arith.mulf %131, %130 : vector<8x128xf32>
    %cst_55 = arith.constant 5.000000e-01 : f32
    %133 = vector.broadcast %cst_55 : f32 to vector<8x128xf32>
    %134 = arith.addf %132, %133 : vector<8x128xf32>
    %135 = arith.mulf %124, %105 : vector<8x128xf32>
    %136 = arith.mulf %123, %126 : vector<8x128xf32>
    %137 = arith.addf %135, %136 : vector<8x128xf32>
    %138 = math.tanh %137 : vector<8x128xf32>
    %139 = arith.mulf %134, %138 : vector<8x128xf32>
    %c4_i32 = arith.constant 4 : i32
    %c8_i32_56 = arith.constant 8 : i32
    %140 = arith.muli %c4_i32, %c8_i32_56 : i32
    %141 = tpu.assume_multiple %140, 8 : i32
    %142 = arith.index_cast %141 : i32 to index
    %c0_57 = arith.constant 0 : index
    %143 = vector.load %arg8[%142, %c0_57] : memref<64x512xf32, #tpu.memory_space<vmem>>, vector<8x512xf32>
    %c0_58 = arith.constant 0 : index
    %c0_59 = arith.constant 0 : index
    %144 = vector.load %arg3[%c0_58, %c0_59] : memref<128x512xf32, #tpu.memory_space<vmem>>, vector<128x512xf32>
    %cst_60 = arith.constant dense<0.000000e+00> : vector<8x512xf32>
    %145 = tpu.matmul %139, %144, %cst_60 {dimension_numbers = #tpu.dot_dimension_numbers<[1], [0], [0], [1], [0, 0, 1, 1], [], []>} : vector<8x128xf32>, vector<128x512xf32>, vector<8x512xf32> -> vector<8x512xf32>
    %146 = arith.addf %143, %145 : vector<8x512xf32>
    %147 = vector.extract_strided_slice %146 {offsets = [0, 0], sizes = [8, 256], strides = [1, 1]} : vector<8x512xf32> to vector<8x256xf32>
    %cst_61 = arith.constant 5.000000e-01 : f32
    %148 = vector.broadcast %cst_61 : f32 to vector<8x256xf32>
    %149 = arith.mulf %148, %147 : vector<8x256xf32>
    %150 = math.tanh %149 : vector<8x256xf32>
    %cst_62 = arith.constant 5.000000e-01 : f32
    %151 = vector.broadcast %cst_62 : f32 to vector<8x256xf32>
    %152 = arith.mulf %151, %150 : vector<8x256xf32>
    %cst_63 = arith.constant 5.000000e-01 : f32
    %153 = vector.broadcast %cst_63 : f32 to vector<8x256xf32>
    %154 = arith.addf %152, %153 : vector<8x256xf32>
    %155 = vector.extract_strided_slice %154 {offsets = [0, 0], sizes = [8, 128], strides = [1, 1]} : vector<8x256xf32> to vector<8x128xf32>
    %156 = vector.extract_strided_slice %154 {offsets = [0, 128], sizes = [8, 128], strides = [1, 1]} : vector<8x256xf32> to vector<8x128xf32>
    %157 = vector.extract_strided_slice %146 {offsets = [0, 256], sizes = [8, 128], strides = [1, 1]} : vector<8x512xf32> to vector<8x128xf32>
    %158 = math.tanh %157 : vector<8x128xf32>
    %159 = vector.extract_strided_slice %146 {offsets = [0, 384], sizes = [8, 128], strides = [1, 1]} : vector<8x512xf32> to vector<8x128xf32>
    %cst_64 = arith.constant 5.000000e-01 : f32
    %160 = vector.broadcast %cst_64 : f32 to vector<8x128xf32>
    %161 = arith.mulf %160, %159 : vector<8x128xf32>
    %162 = math.tanh %161 : vector<8x128xf32>
    %cst_65 = arith.constant 5.000000e-01 : f32
    %163 = vector.broadcast %cst_65 : f32 to vector<8x128xf32>
    %164 = arith.mulf %163, %162 : vector<8x128xf32>
    %cst_66 = arith.constant 5.000000e-01 : f32
    %165 = vector.broadcast %cst_66 : f32 to vector<8x128xf32>
    %166 = arith.addf %164, %165 : vector<8x128xf32>
    %167 = arith.mulf %156, %137 : vector<8x128xf32>
    %168 = arith.mulf %155, %158 : vector<8x128xf32>
    %169 = arith.addf %167, %168 : vector<8x128xf32>
    %170 = math.tanh %169 : vector<8x128xf32>
    %171 = arith.mulf %166, %170 : vector<8x128xf32>
    %c5_i32 = arith.constant 5 : i32
    %c8_i32_67 = arith.constant 8 : i32
    %172 = arith.muli %c5_i32, %c8_i32_67 : i32
    %173 = tpu.assume_multiple %172, 8 : i32
    %174 = arith.index_cast %173 : i32 to index
    %c0_68 = arith.constant 0 : index
    %175 = vector.load %arg8[%174, %c0_68] : memref<64x512xf32, #tpu.memory_space<vmem>>, vector<8x512xf32>
    %c0_69 = arith.constant 0 : index
    %c0_70 = arith.constant 0 : index
    %176 = vector.load %arg3[%c0_69, %c0_70] : memref<128x512xf32, #tpu.memory_space<vmem>>, vector<128x512xf32>
    %cst_71 = arith.constant dense<0.000000e+00> : vector<8x512xf32>
    %177 = tpu.matmul %171, %176, %cst_71 {dimension_numbers = #tpu.dot_dimension_numbers<[1], [0], [0], [1], [0, 0, 1, 1], [], []>} : vector<8x128xf32>, vector<128x512xf32>, vector<8x512xf32> -> vector<8x512xf32>
    %178 = arith.addf %175, %177 : vector<8x512xf32>
    %179 = vector.extract_strided_slice %178 {offsets = [0, 0], sizes = [8, 256], strides = [1, 1]} : vector<8x512xf32> to vector<8x256xf32>
    %cst_72 = arith.constant 5.000000e-01 : f32
    %180 = vector.broadcast %cst_72 : f32 to vector<8x256xf32>
    %181 = arith.mulf %180, %179 : vector<8x256xf32>
    %182 = math.tanh %181 : vector<8x256xf32>
    %cst_73 = arith.constant 5.000000e-01 : f32
    %183 = vector.broadcast %cst_73 : f32 to vector<8x256xf32>
    %184 = arith.mulf %183, %182 : vector<8x256xf32>
    %cst_74 = arith.constant 5.000000e-01 : f32
    %185 = vector.broadcast %cst_74 : f32 to vector<8x256xf32>
    %186 = arith.addf %184, %185 : vector<8x256xf32>
    %187 = vector.extract_strided_slice %186 {offsets = [0, 0], sizes = [8, 128], strides = [1, 1]} : vector<8x256xf32> to vector<8x128xf32>
    %188 = vector.extract_strided_slice %186 {offsets = [0, 128], sizes = [8, 128], strides = [1, 1]} : vector<8x256xf32> to vector<8x128xf32>
    %189 = vector.extract_strided_slice %178 {offsets = [0, 256], sizes = [8, 128], strides = [1, 1]} : vector<8x512xf32> to vector<8x128xf32>
    %190 = math.tanh %189 : vector<8x128xf32>
    %191 = vector.extract_strided_slice %178 {offsets = [0, 384], sizes = [8, 128], strides = [1, 1]} : vector<8x512xf32> to vector<8x128xf32>
    %cst_75 = arith.constant 5.000000e-01 : f32
    %192 = vector.broadcast %cst_75 : f32 to vector<8x128xf32>
    %193 = arith.mulf %192, %191 : vector<8x128xf32>
    %194 = math.tanh %193 : vector<8x128xf32>
    %cst_76 = arith.constant 5.000000e-01 : f32
    %195 = vector.broadcast %cst_76 : f32 to vector<8x128xf32>
    %196 = arith.mulf %195, %194 : vector<8x128xf32>
    %cst_77 = arith.constant 5.000000e-01 : f32
    %197 = vector.broadcast %cst_77 : f32 to vector<8x128xf32>
    %198 = arith.addf %196, %197 : vector<8x128xf32>
    %199 = arith.mulf %188, %169 : vector<8x128xf32>
    %200 = arith.mulf %187, %190 : vector<8x128xf32>
    %201 = arith.addf %199, %200 : vector<8x128xf32>
    %202 = math.tanh %201 : vector<8x128xf32>
    %203 = arith.mulf %198, %202 : vector<8x128xf32>
    %c6_i32 = arith.constant 6 : i32
    %c8_i32_78 = arith.constant 8 : i32
    %204 = arith.muli %c6_i32, %c8_i32_78 : i32
    %205 = tpu.assume_multiple %204, 8 : i32
    %206 = arith.index_cast %205 : i32 to index
    %c0_79 = arith.constant 0 : index
    %207 = vector.load %arg8[%206, %c0_79] : memref<64x512xf32, #tpu.memory_space<vmem>>, vector<8x512xf32>
    %c0_80 = arith.constant 0 : index
    %c0_81 = arith.constant 0 : index
    %208 = vector.load %arg3[%c0_80, %c0_81] : memref<128x512xf32, #tpu.memory_space<vmem>>, vector<128x512xf32>
    %cst_82 = arith.constant dense<0.000000e+00> : vector<8x512xf32>
    %209 = tpu.matmul %203, %208, %cst_82 {dimension_numbers = #tpu.dot_dimension_numbers<[1], [0], [0], [1], [0, 0, 1, 1], [], []>} : vector<8x128xf32>, vector<128x512xf32>, vector<8x512xf32> -> vector<8x512xf32>
    %210 = arith.addf %207, %209 : vector<8x512xf32>
    %211 = vector.extract_strided_slice %210 {offsets = [0, 0], sizes = [8, 256], strides = [1, 1]} : vector<8x512xf32> to vector<8x256xf32>
    %cst_83 = arith.constant 5.000000e-01 : f32
    %212 = vector.broadcast %cst_83 : f32 to vector<8x256xf32>
    %213 = arith.mulf %212, %211 : vector<8x256xf32>
    %214 = math.tanh %213 : vector<8x256xf32>
    %cst_84 = arith.constant 5.000000e-01 : f32
    %215 = vector.broadcast %cst_84 : f32 to vector<8x256xf32>
    %216 = arith.mulf %215, %214 : vector<8x256xf32>
    %cst_85 = arith.constant 5.000000e-01 : f32
    %217 = vector.broadcast %cst_85 : f32 to vector<8x256xf32>
    %218 = arith.addf %216, %217 : vector<8x256xf32>
    %219 = vector.extract_strided_slice %218 {offsets = [0, 0], sizes = [8, 128], strides = [1, 1]} : vector<8x256xf32> to vector<8x128xf32>
    %220 = vector.extract_strided_slice %218 {offsets = [0, 128], sizes = [8, 128], strides = [1, 1]} : vector<8x256xf32> to vector<8x128xf32>
    %221 = vector.extract_strided_slice %210 {offsets = [0, 256], sizes = [8, 128], strides = [1, 1]} : vector<8x512xf32> to vector<8x128xf32>
    %222 = math.tanh %221 : vector<8x128xf32>
    %223 = vector.extract_strided_slice %210 {offsets = [0, 384], sizes = [8, 128], strides = [1, 1]} : vector<8x512xf32> to vector<8x128xf32>
    %cst_86 = arith.constant 5.000000e-01 : f32
    %224 = vector.broadcast %cst_86 : f32 to vector<8x128xf32>
    %225 = arith.mulf %224, %223 : vector<8x128xf32>
    %226 = math.tanh %225 : vector<8x128xf32>
    %cst_87 = arith.constant 5.000000e-01 : f32
    %227 = vector.broadcast %cst_87 : f32 to vector<8x128xf32>
    %228 = arith.mulf %227, %226 : vector<8x128xf32>
    %cst_88 = arith.constant 5.000000e-01 : f32
    %229 = vector.broadcast %cst_88 : f32 to vector<8x128xf32>
    %230 = arith.addf %228, %229 : vector<8x128xf32>
    %231 = arith.mulf %220, %201 : vector<8x128xf32>
    %232 = arith.mulf %219, %222 : vector<8x128xf32>
    %233 = arith.addf %231, %232 : vector<8x128xf32>
    %234 = math.tanh %233 : vector<8x128xf32>
    %235 = arith.mulf %230, %234 : vector<8x128xf32>
    %c7_i32 = arith.constant 7 : i32
    %c8_i32_89 = arith.constant 8 : i32
    %236 = arith.muli %c7_i32, %c8_i32_89 : i32
    %237 = tpu.assume_multiple %236, 8 : i32
    %238 = arith.index_cast %237 : i32 to index
    %c0_90 = arith.constant 0 : index
    %239 = vector.load %arg8[%238, %c0_90] : memref<64x512xf32, #tpu.memory_space<vmem>>, vector<8x512xf32>
    %c0_91 = arith.constant 0 : index
    %c0_92 = arith.constant 0 : index
    %240 = vector.load %arg3[%c0_91, %c0_92] : memref<128x512xf32, #tpu.memory_space<vmem>>, vector<128x512xf32>
    %cst_93 = arith.constant dense<0.000000e+00> : vector<8x512xf32>
    %241 = tpu.matmul %235, %240, %cst_93 {dimension_numbers = #tpu.dot_dimension_numbers<[1], [0], [0], [1], [0, 0, 1, 1], [], []>} : vector<8x128xf32>, vector<128x512xf32>, vector<8x512xf32> -> vector<8x512xf32>
    %242 = arith.addf %239, %241 : vector<8x512xf32>
    %243 = vector.extract_strided_slice %242 {offsets = [0, 0], sizes = [8, 256], strides = [1, 1]} : vector<8x512xf32> to vector<8x256xf32>
    %cst_94 = arith.constant 5.000000e-01 : f32
    %244 = vector.broadcast %cst_94 : f32 to vector<8x256xf32>
    %245 = arith.mulf %244, %243 : vector<8x256xf32>
    %246 = math.tanh %245 : vector<8x256xf32>
    %cst_95 = arith.constant 5.000000e-01 : f32
    %247 = vector.broadcast %cst_95 : f32 to vector<8x256xf32>
    %248 = arith.mulf %247, %246 : vector<8x256xf32>
    %cst_96 = arith.constant 5.000000e-01 : f32
    %249 = vector.broadcast %cst_96 : f32 to vector<8x256xf32>
    %250 = arith.addf %248, %249 : vector<8x256xf32>
    %251 = vector.extract_strided_slice %250 {offsets = [0, 0], sizes = [8, 128], strides = [1, 1]} : vector<8x256xf32> to vector<8x128xf32>
    %252 = vector.extract_strided_slice %250 {offsets = [0, 128], sizes = [8, 128], strides = [1, 1]} : vector<8x256xf32> to vector<8x128xf32>
    %253 = vector.extract_strided_slice %242 {offsets = [0, 256], sizes = [8, 128], strides = [1, 1]} : vector<8x512xf32> to vector<8x128xf32>
    %254 = math.tanh %253 : vector<8x128xf32>
    %255 = vector.extract_strided_slice %242 {offsets = [0, 384], sizes = [8, 128], strides = [1, 1]} : vector<8x512xf32> to vector<8x128xf32>
    %cst_97 = arith.constant 5.000000e-01 : f32
    %256 = vector.broadcast %cst_97 : f32 to vector<8x128xf32>
    %257 = arith.mulf %256, %255 : vector<8x128xf32>
    %258 = math.tanh %257 : vector<8x128xf32>
    %cst_98 = arith.constant 5.000000e-01 : f32
    %259 = vector.broadcast %cst_98 : f32 to vector<8x128xf32>
    %260 = arith.mulf %259, %258 : vector<8x128xf32>
    %cst_99 = arith.constant 5.000000e-01 : f32
    %261 = vector.broadcast %cst_99 : f32 to vector<8x128xf32>
    %262 = arith.addf %260, %261 : vector<8x128xf32>
    %263 = arith.mulf %252, %233 : vector<8x128xf32>
    %264 = arith.mulf %251, %254 : vector<8x128xf32>
    %265 = arith.addf %263, %264 : vector<8x128xf32>
    %266 = math.tanh %265 : vector<8x128xf32>
    %267 = arith.mulf %262, %266 : vector<8x128xf32>
    %c8_i32_100 = arith.constant 8 : i32
    %c0_101 = arith.constant 0 : index
    %c0_102 = arith.constant 0 : index
    %268 = vector.load %arg9[%c0_101, %c0_102] : memref<8x128xf32, #tpu.memory_space<vmem>>, vector<8x128xf32>
    tpu.vector_store %arg9[%c0_101, %c0_102], %267 {strides = array<i32>} : memref<8x128xf32, #tpu.memory_space<vmem>>, vector<8x128xf32>,
    %c0_103 = arith.constant 0 : index
    %c0_104 = arith.constant 0 : index
    %269 = vector.load %arg10[%c0_103, %c0_104] : memref<8x128xf32, #tpu.memory_space<vmem>>, vector<8x128xf32>
    tpu.vector_store %arg10[%c0_103, %c0_104], %265 {strides = array<i32>} : memref<8x128xf32, #tpu.memory_space<vmem>>, vector<8x128xf32>,
    %c0_i32_105 = arith.constant 0 : i32
    %270 = arith.cmpi eq, %arg0, %c0_i32_105 : i32
    %271 = arith.extui %270 : i1 to i32
    %c0_i32_106 = arith.constant 0 : i32
    %272 = arith.cmpi ne, %271, %c0_i32_106 : i32
    scf.if %272 {
      %c0_107 = arith.constant 0 : index
      %c0_108 = arith.constant 0 : index
      %273 = vector.load %arg5[%c0_107, %c0_108] : memref<128x128xf32, #tpu.memory_space<vmem>>, vector<128x128xf32>
      %cst_109 = arith.constant dense<0.000000e+00> : vector<8x128xf32>
      %274 = tpu.matmul %267, %273, %cst_109 {dimension_numbers = #tpu.dot_dimension_numbers<[1], [0], [0], [1], [0, 0, 1, 1], [], []>} : vector<8x128xf32>, vector<128x128xf32>, vector<8x128xf32> -> vector<8x128xf32>
      %c0_110 = arith.constant 0 : index
      %c0_111 = arith.constant 0 : index
      %275 = vector.load %arg6[%c0_110, %c0_111] : memref<1x128xf32, #tpu.memory_space<vmem>>, vector<1x128xf32>
      %276 = vector.broadcast %275 : vector<1x128xf32> to vector<8x128xf32>
      %277 = arith.addf %274, %276 : vector<8x128xf32>
      %c0_112 = arith.constant 0 : index
      %c0_113 = arith.constant 0 : index
      %278 = vector.load %arg7[%c0_112, %c0_113] : memref<8x128xf32, #tpu.memory_space<vmem>>, vector<8x128xf32>
      tpu.vector_store %arg7[%c0_112, %c0_113], %277 {strides = array<i32>} : memref<8x128xf32, #tpu.memory_space<vmem>>, vector<8x128xf32>,
    } else {
    }
    return
  }
  func.func @transform_0(%arg0: i32) -> (i32, i32) {
    %c0_i32 = arith.constant 0 : i32
    %c0_i32_0 = arith.constant 0 : i32
    return %arg0, %c0_i32 : i32, i32
  }
  func.func @transform_1(%arg0: i32) -> (i32, i32) {
    %c0_i32 = arith.constant 0 : i32
    %c0_i32_0 = arith.constant 0 : i32
    %c0_i32_1 = arith.constant 0 : i32
    return %c0_i32, %c0_i32_0 : i32, i32
  }
  func.func @transform_2(%arg0: i32) -> (i32, i32) {
    %c0_i32 = arith.constant 0 : i32
    %c0_i32_0 = arith.constant 0 : i32
    %c0_i32_1 = arith.constant 0 : i32
    return %c0_i32, %c0_i32_0 : i32, i32
  }
  func.func @transform_3(%arg0: i32) -> (i32, i32) {
    %c0_i32 = arith.constant 0 : i32
    %c0_i32_0 = arith.constant 0 : i32
    %c0_i32_1 = arith.constant 0 : i32
    return %c0_i32, %c0_i32_0 : i32, i32
  }
  func.func @transform_4(%arg0: i32) -> (i32, i32) {
    %c0_i32 = arith.constant 0 : i32
    %c0_i32_0 = arith.constant 0 : i32
    %c0_i32_1 = arith.constant 0 : i32
    return %c0_i32, %c0_i32_0 : i32, i32
  }
  func.func @transform_5(%arg0: i32) -> (i32, i32) {
    %c0_i32 = arith.constant 0 : i32
    %c0_i32_0 = arith.constant 0 : i32
    %c0_i32_1 = arith.constant 0 : i32
    return %c0_i32, %c0_i32_0 : i32, i32
  }
  func.func @transform_6(%arg0: i32) -> (i32, i32) {
    %c0_i32 = arith.constant 0 : i32
    %c0_i32_0 = arith.constant 0 : i32
    %c0_i32_1 = arith.constant 0 : i32
    return %c0_i32, %c0_i32_0 : i32, i32
  }
}

</mosaic_0001>

<llo_original>
// kernel: tpu_custom_call.1
$region0: #{tpu_custom_call.1}
  #allocation0 [shape = 'u32[]', space=smem, size = 0x4, offset = 0x4, fixed_abs, tag = 'smem constant byte address 0x4 - core index']
  #allocation1 [shape = 'u32[144,128]{1,0:T(1,128)}', space=vmem, size = 0x12000, scoped, tag = 'internal scratch']
  #allocation2 [shape = 'f32[64,512]{1,0:T(8,128)}', space=vmem, size = 0x20000, scoped, tag = 'scratch operand']
  #allocation3 [shape = 'f32[8,128]{1,0:T(8,128)}', space=vmem, size = 0x1000, scoped, tag = 'scratch operand']
  #allocation4 [shape = 'f32[8,128]{1,0:T(8,128)}', space=vmem, size = 0x1000, scoped, tag = 'scratch operand']
  %s0 = inlined_call_operand.hbm [shape: f32[64,128], index: 0, kind: input, shape index: {}]
  %s1 = inlined_call_operand.hbm [shape: f32[128,512], index: 1, kind: input, shape index: {}]
  %s2 = inlined_call_operand.hbm [shape: f32[128,512], index: 2, kind: input, shape index: {}]
  %s3 = inlined_call_operand.vmem [shape: f32[1,512], index: 3, kind: input, shape index: {}]
  %s4 = inlined_call_operand.hbm [shape: f32[128,128], index: 4, kind: input, shape index: {}]
  %s5 = inlined_call_operand.vmem [shape: f32[1,128], index: 5, kind: input, shape index: {}]
  %s6 = inlined_call_operand.hbm [shape: f32[8,128], index: 6, kind: output, shape index: {}]
  %s7 = sld [smem:[#allocation0]]
  $region58: #{tpu_custom_call.1} parent=0
    _
  %s9 = ssub.s32 1, %s7
  %s10 = scalar_select 0, %s9, %s7
  $region1: #{tpu_custom_call.1} parent=0
    #allocation5 [shape = 'u8[32768]{0}', space=vmem, size = 0x8000, scoped, tag = 'input window, operand 0, single buffered']
    #allocation6 [shape = 's32[1]{0}', space=sflag, size = 0x4, scoped, tag = 'scoped memory for tpu_custom_call.1']
    #allocation7 [shape = 's32[1]{0}', space=sflag, size = 0x4, scoped, tag = 'scoped memory for tpu_custom_call.1']
    #allocation8 [shape = 'u8[262144]{0}', space=vmem, size = 0x40000, scoped, tag = 'input window, operand 1, single buffered']
    #allocation9 [shape = 's32[1]{0}', space=sflag, size = 0x4, scoped, tag = 'scoped memory for tpu_custom_call.1']
    #allocation10 [shape = 'u8[262144]{0}', space=vmem, size = 0x40000, scoped, tag = 'input window, operand 2, single buffered']
    #allocation11 [shape = 'u8[65536]{0}', space=vmem, size = 0x10000, scoped, tag = 'input window, operand 4, single buffered']
    #allocation12 [shape = 's32[1]{0}', space=sflag, size = 0x4, scoped, tag = 'scoped memory for tpu_custom_call.1']
    #allocation13 [shape = 'u8[4096]{0}', space=vmem, size = 0x1000, scoped, tag = 'output window, operand 0, single buffered']
    %11 = vsyncpa [#allocation6], 0
    %12 = vsyncpa [#allocation9], 0
    %13 = vsyncpa [#allocation12], 0
    %14 = vsyncpa [#allocation7], 0
    // Predicated region
    $region2: #{tpu_custom_call.1} parent=1 // pred_check
      _
    $region3: #{tpu_custom_call.1} parent=1 // pred_check_branch
      %16 = sbr.rel (0) target = $region5
    $region4: #{tpu_custom_call.1} parent=1 // pred_region
      %s18 = ssub.s32 1024, 1024
      %19 = vsyncadd [#allocation6], %s18
      %s20 = sshll.u32 [#allocation5], 4
      %s21 = int_to_ptr.vmem [resolvable:$true] %s20
      %26 = dma.hbm_to_vmem [thread:$0]  %s0, 1024, %s21, [#allocation6], 128, 128, 8
    $region5: #{tpu_custom_call.1} parent=1 // pred_fallthru
      _
    // Predicated region
    $region6: #{tpu_custom_call.1} parent=1 // pred_check
      _
    $region7: #{tpu_custom_call.1} parent=1 // pred_check_branch
      %28 = sbr.rel (0) target = $region9
    $region8: #{tpu_custom_call.1} parent=1 // pred_region
      %s30 = ssub.s32 8192, 8192
      %31 = vsyncadd [#allocation9], %s30
      %s32 = sshll.u32 [#allocation8], 4
      %s33 = int_to_ptr.vmem [resolvable:$true] %s32
      %38 = dma.hbm_to_vmem [thread:$0]  %s1, 8192, %s33, [#allocation9], 512, 512, 32
    $region9: #{tpu_custom_call.1} parent=1 // pred_fallthru
      _
    // Predicated region
    $region10: #{tpu_custom_call.1} parent=1 // pred_check
      _
    $region11: #{tpu_custom_call.1} parent=1 // pred_check_branch
      %40 = sbr.rel (0) target = $region13
    $region12: #{tpu_custom_call.1} parent=1 // pred_region
      %s42 = ssub.s32 8192, 8192
      %43 = vsyncadd [#allocation9], %s42
      %s44 = sshll.u32 [#allocation10], 4
      %s45 = int_to_ptr.vmem [resolvable:$true] %s44
      %50 = dma.hbm_to_vmem [thread:$0]  %s2, 8192, %s45, [#allocation9], 512, 512, 32
    $region13: #{tpu_custom_call.1} parent=1 // pred_fallthru
      _
    // Predicated region
    $region14: #{tpu_custom_call.1} parent=1 // pred_check
      _
    $region15: #{tpu_custom_call.1} parent=1 // pred_check_branch
      %52 = sbr.rel (0) target = $region17
    $region16: #{tpu_custom_call.1} parent=1 // pred_region
      _
    $region17: #{tpu_custom_call.1} parent=1 // pred_fallthru
      _
    // Predicated region
    $region18: #{tpu_custom_call.1} parent=1 // pred_check
      _
    $region19: #{tpu_custom_call.1} parent=1 // pred_check_branch
      %54 = sbr.rel (0) target = $region21
    $region20: #{tpu_custom_call.1} parent=1 // pred_region
      %s56 = ssub.s32 2048, 2048
      %57 = vsyncadd [#allocation12], %s56
      %s58 = sshll.u32 [#allocation11], 4
      %s59 = int_to_ptr.vmem [resolvable:$true] %s58
      %64 = dma.hbm_to_vmem [thread:$0]  %s4, 2048, %s59, [#allocation12], 128, 128, 8
    $region21: #{tpu_custom_call.1} parent=1 // pred_fallthru
      _
    // Predicated region
    $region22: #{tpu_custom_call.1} parent=1 // pred_check
      _
    $region23: #{tpu_custom_call.1} parent=1 // pred_check_branch
      %66 = sbr.rel (0) target = $region25
    $region24: #{tpu_custom_call.1} parent=1 // pred_region
      _
    $region25: #{tpu_custom_call.1} parent=1 // pred_fallthru
      _
    // Predicated region
    $region26: #{tpu_custom_call.1} parent=1 // pred_check
      _
    $region27: #{tpu_custom_call.1} parent=1 // pred_check_branch
      %68 = sbr.rel (0) target = $region29
    $region28: #{tpu_custom_call.1} parent=1 // pred_region
      %69 = dma.done [#allocation6], 1024
    $region29: #{tpu_custom_call.1} parent=1 // pred_fallthru
      _
    // Predicated region
    $region30: #{tpu_custom_call.1} parent=1 // pred_check
      _
    $region31: #{tpu_custom_call.1} parent=1 // pred_check_branch
      %71 = sbr.rel (0) target = $region33
    $region32: #{tpu_custom_call.1} parent=1 // pred_region
      %72 = dma.done [#allocation9], 8192
    $region33: #{tpu_custom_call.1} parent=1 // pred_fallthru
      _
    // Predicated region
    $region34: #{tpu_custom_call.1} parent=1 // pred_check
      _
    $region35: #{tpu_custom_call.1} parent=1 // pred_check_branch
      %74 = sbr.rel (0) target = $region37
    $region36: #{tpu_custom_call.1} parent=1 // pred_region
      %75 = dma.done [#allocation9], 8192
    $region37: #{tpu_custom_call.1} parent=1 // pred_fallthru
      _
    // Predicated region
    $region38: #{tpu_custom_call.1} parent=1 // pred_check
      _
    $region39: #{tpu_custom_call.1} parent=1 // pred_check_branch
      %77 = sbr.rel (0) target = $region41
    $region40: #{tpu_custom_call.1} parent=1 // pred_region
      %78 = dma.done [#allocation12], 2048
    $region41: #{tpu_custom_call.1} parent=1 // pred_fallthru
      _
    %p79 = scmp.eq.s32.totalorder 0, 0
    // Predicated region
    $region42: #{tpu_custom_call.1} parent=1 // pred_check
      %p80 = pneg %p79
    $region43: #{tpu_custom_call.1} parent=1 // pred_check_branch
      %82 = sbr.rel (%p80) target = $region45
    $region44: #{tpu_custom_call.1} parent=1 // pred_region
      %83 = vst [vmem:[#allocation3] sm:$0xff] 0.0
      %84 = vst [vmem:[#allocation4] sm:$0xff] 0.0
    $region45: #{tpu_custom_call.1} parent=1 // pred_fallthru
      _
    %v85 = vld [vmem:[#allocation5] sm:$0xff]
    %v86 = vld [vmem:[#allocation5 + $0x8] sm:$0xff]
    %v87 = vld [vmem:[#allocation5 + $0x10] sm:$0xff]
    %v88 = vld [vmem:[#allocation5 + $0x18] sm:$0xff]
    %v89 = vld [vmem:[#allocation5 + $0x20] sm:$0xff]
    %v90 = vld [vmem:[#allocation5 + $0x28] sm:$0xff]
    %v91 = vld [vmem:[#allocation5 + $0x30] sm:$0xff]
    %v92 = vld [vmem:[#allocation5 + $0x38] sm:$0xff]
    %v93 = vld [vmem:[#allocation8] sm:$0xff]
    %v94 = vld [vmem:[#allocation8 + $0x8] sm:$0xff]
    %v95 = vld [vmem:[#allocation8 + $0x10] sm:$0xff]
    %v96 = vld [vmem:[#allocation8 + $0x18] sm:$0xff]
    %v97 = vld [vmem:[#allocation8 + $0x20] sm:$0xff]
    %v98 = vld [vmem:[#allocation8 + $0x28] sm:$0xff]
    %v99 = vld [vmem:[#allocation8 + $0x30] sm:$0xff]
    %v100 = vld [vmem:[#allocation8 + $0x38] sm:$0xff]
    %v101 = vld [vmem:[#allocation8 + $0x40] sm:$0xff]
    %v102 = vld [vmem:[#allocation8 + $0x48] sm:$0xff]
    %v103 = vld [vmem:[#allocation8 + $0x50] sm:$0xff]
    %v104 = vld [vmem:[#allocation8 + $0x58] sm:$0xff]
    %v105 = vld [vmem:[#allocation8 + $0x60] sm:$0xff]
    %v106 = vld [vmem:[#allocation8 + $0x68] sm:$0xff]
    %v107 = vld [vmem:[#allocation8 + $0x70] sm:$0xff]
    %v108 = vld [vmem:[#allocation8 + $0x78] sm:$0xff]
    %v109 = vld [vmem:[#allocation8 + $0x80] sm:$0xff]
    %v110 = vld [vmem:[#allocation8 + $0x88] sm:$0xff]
    %v111 = vld [vmem:[#allocation8 + $0x90] sm:$0xff]
    %v112 = vld [vmem:[#allocation8 + $0x98] sm:$0xff]
    %v113 = vld [vmem:[#allocation8 + $0xa0] sm:$0xff]
    %v114 = vld [vmem:[#allocation8 + $0xa8] sm:$0xff]
    %v115 = vld [vmem:[#allocation8 + $0xb0] sm:$0xff]
    %v116 = vld [vmem:[#allocation8 + $0xb8] sm:$0xff]
    %v117 = vld [vmem:[#allocation8 + $0xc0] sm:$0xff]
    %v118 = vld [vmem:[#allocation8 + $0xc8] sm:$0xff]
    %v119 = vld [vmem:[#allocation8 + $0xd0] sm:$0xff]
    %v120 = vld [vmem:[#allocation8 + $0xd8] sm:$0xff]
    %v121 = vld [vmem:[#allocation8 + $0xe0] sm:$0xff]
    %v122 = vld [vmem:[#allocation8 + $0xe8] sm:$0xff]
    %v123 = vld [vmem:[#allocation8 + $0xf0] sm:$0xff]
    %v124 = vld [vmem:[#allocation8 + $0xf8] sm:$0xff]
    %v125 = vld [vmem:[#allocation8 + $0x100] sm:$0xff]
    %v126 = vld [vmem:[#allocation8 + $0x108] sm:$0xff]
    %v127 = vld [vmem:[#allocation8 + $0x110] sm:$0xff]
    %v128 = vld [vmem:[#allocation8 + $0x118] sm:$0xff]
    %v129 = vld [vmem:[#allocation8 + $0x120] sm:$0xff]
    %v130 = vld [vmem:[#allocation8 + $0x128] sm:$0xff]
    %v131 = vld [vmem:[#allocation8 + $0x130] sm:$0xff]
    %v132 = vld [vmem:[#allocation8 + $0x138] sm:$0xff]
    %v133 = vld [vmem:[#allocation8 + $0x140] sm:$0xff]
    %v134 = vld [vmem:[#allocation8 + $0x148] sm:$0xff]
    %v135 = vld [vmem:[#allocation8 + $0x150] sm:$0xff]
    %v136 = vld [vmem:[#allocation8 + $0x158] sm:$0xff]
    %v137 = vld [vmem:[#allocation8 + $0x160] sm:$0xff]
    %v138 = vld [vmem:[#allocation8 + $0x168] sm:$0xff]
    %v139 = vld [vmem:[#allocation8 + $0x170] sm:$0xff]
    %v140 = vld [vmem:[#allocation8 + $0x178] sm:$0xff]
    %v141 = vld [vmem:[#allocation8 + $0x180] sm:$0xff]
    %v142 = vld [vmem:[#allocation8 + $0x188] sm:$0xff]
    %v143 = vld [vmem:[#allocation8 + $0x190] sm:$0xff]
    %v144 = vld [vmem:[#allocation8 + $0x198] sm:$0xff]
    %v145 = vld [vmem:[#allocation8 + $0x1a0] sm:$0xff]
    %v146 = vld [vmem:[#allocation8 + $0x1a8] sm:$0xff]
    %v147 = vld [vmem:[#allocation8 + $0x1b0] sm:$0xff]
    %v148 = vld [vmem:[#allocation8 + $0x1b8] sm:$0xff]
    %v149 = vld [vmem:[#allocation8 + $0x1c0] sm:$0xff]
    %v150 = vld [vmem:[#allocation8 + $0x1c8] sm:$0xff]
    %v151 = vld [vmem:[#allocation8 + $0x1d0] sm:$0xff]
    %v152 = vld [vmem:[#allocation8 + $0x1d8] sm:$0xff]
    %v153 = vld [vmem:[#allocation8 + $0x1e0] sm:$0xff]
    %v154 = vld [vmem:[#allocation8 + $0x1e8] sm:$0xff]
    %v155 = vld [vmem:[#allocation8 + $0x1f0] sm:$0xff]
    %v156 = vld [vmem:[#allocation8 + $0x1f8] sm:$0xff]
    %v157 = vld [vmem:[%s3] sm:$0xf]
    %v159 = vlaneseq
    %v160 = vshrl.u32 %v159, 7
    %v161 = vsub.s32 0, %v160
    %v162 = vrot.slane %v157, %v161
    %v163 = vlaneseq
    %v164 = vshrl.u32 %v163, 7
    %v165 = vsub.s32 1, %v164
    %v166 = vrot.slane %v157, %v165
    %v167 = vlaneseq
    %v168 = vshrl.u32 %v167, 7
    %v169 = vsub.s32 2, %v168
    %v170 = vrot.slane %v157, %v169
    %v171 = vlaneseq
    %v172 = vshrl.u32 %v171, 7
    %v173 = vsub.s32 3, %v172
    %v174 = vrot.slane %v157, %v173
    %179 = vmatprep.subr.mxu0 %v154
    %180 = vmatpush1.msra.mxu0 %v153
    %181 = vmatprep.subr.mxu0 %v150
    %182 = vmatpush1.msra.mxu0 %v149
    %183 = vmatprep.subr.mxu0 %v146
    %184 = vmatpush1.msra.mxu0 %v145
    %185 = vmatprep.subr.mxu0 %v142
    %186 = vmatpush1.msra.mxu0 %v141
    %187 = vmatprep.subr.mxu0 %v138
    %188 = vmatpush1.msra.mxu0 %v137
    %189 = vmatprep.subr.mxu0 %v134
    %190 = vmatpush1.msra.mxu0 %v133
    %191 = vmatprep.subr.mxu0 %v130
    %192 = vmatpush1.msra.mxu0 %v129
    %193 = vmatprep.subr.mxu0 %v126
    %194 = vmatpush1.msra.mxu0 %v125
    %195 = vmatprep.subr.mxu0 %v122
    %196 = vmatpush1.msra.mxu0 %v121
    %197 = vmatprep.subr.mxu0 %v118
    %198 = vmatpush1.msra.mxu0 %v117
    %199 = vmatprep.subr.mxu0 %v114
    %200 = vmatpush1.msra.mxu0 %v113
    %201 = vmatprep.subr.mxu0 %v110
    %202 = vmatpush1.msra.mxu0 %v109
    %203 = vmatprep.subr.mxu0 %v106
    %204 = vmatpush1.msra.mxu0 %v105
    %205 = vmatprep.subr.mxu0 %v102
    %206 = vmatpush1.msra.mxu0 %v101
    %207 = vmatprep.subr.mxu0 %v98
    %208 = vmatpush1.msra.mxu0 %v97
    %209 = vmatprep.subr.mxu0 %v94
    %210 = vmatpush1.msra.mxu0 %v93
    %211 = vmatprep.subr.mxu0 0.0
    %212 = vmatpush2.msra.mxu0 0.0
    %213 = vmatprep.subr.mxu0 0.0
    %214 = vmatpush2.msra.mxu0 0.0
    %215 = vmatprep.subr.mxu0 0.0
    %216 = vmatpush2.msra.mxu0 0.0
    %217 = vmatprep.subr.mxu0 0.0
    %218 = vmatpush2.msra.mxu0 0.0
    %219 = vmatprep.subr.mxu0 0.0
    %220 = vmatpush2.msra.mxu0 0.0
    %221 = vmatprep.subr.mxu0 0.0
    %222 = vmatpush2.msra.mxu0 0.0
    %223 = vmatprep.subr.mxu0 0.0
    %224 = vmatpush2.msra.mxu0 0.0
    %225 = vmatprep.subr.mxu0 0.0
    %226 = vmatpush2.msra.mxu0 0.0
    %227 = vmatprep.subr.mxu0 0.0
    %228 = vmatpush2.msra.mxu0 0.0
    %229 = vmatprep.subr.mxu0 0.0
    %230 = vmatpush2.msra.mxu0 0.0
    %231 = vmatprep.subr.mxu0 0.0
    %232 = vmatpush2.msra.mxu0 0.0
    %233 = vmatprep.subr.mxu0 0.0
    %234 = vmatpush2.msra.mxu0 0.0
    %235 = vmatprep.subr.mxu0 0.0
    %236 = vmatpush2.msra.mxu0 0.0
    %237 = vmatprep.subr.mxu0 0.0
    %238 = vmatpush2.msra.mxu0 0.0
    %239 = vmatprep.subr.mxu0 0.0
    %240 = vmatpush2.msra.mxu0 0.0
    %241 = vmatprep.subr.mxu0 0.0
    %242 = vmatpush2.msra.mxu0 0.0
    %243 = vmatprep.mubr.f32.mxu0 0.0
    %244 = vmatmul.mubr.f32.gmra.mxu0 %v85
    %v245 = vpop.f32.mrf.mxu0
    %v246 = vadd.f32 %v162, %v245
    %v247 = vpop.f32.mrf.mxu0
    %v248 = vadd.f32 %v166, %v247
    %249 = vmatprep.mubr.f32.mxu0 0.0
    %250 = vmatmul.mubr.f32.gmra.mxu0 %v86
    %v251 = vpop.f32.mrf.mxu0
    %v252 = vadd.f32 %v162, %v251
    %v253 = vpop.f32.mrf.mxu0
    %v254 = vadd.f32 %v166, %v253
    %255 = vmatprep.mubr.f32.mxu0 0.0
    %256 = vmatmul.mubr.f32.gmra.mxu0 %v87
    %v257 = vpop.f32.mrf.mxu0
    %v258 = vadd.f32 %v162, %v257
    %v259 = vpop.f32.mrf.mxu0
    %v260 = vadd.f32 %v166, %v259
    %261 = vmatprep.mubr.f32.mxu0 0.0
    %262 = vmatmul.mubr.f32.gmra.mxu0 %v88
    %v263 = vpop.f32.mrf.mxu0
    %v264 = vadd.f32 %v162, %v263
    %v265 = vpop.f32.mrf.mxu0
    %v266 = vadd.f32 %v166, %v265
    %267 = vmatprep.mubr.f32.mxu0 0.0
    %268 = vmatmul.mubr.f32.gmra.mxu0 %v89
    %v269 = vpop.f32.mrf.mxu0
    %v270 = vadd.f32 %v162, %v269
    %v271 = vpop.f32.mrf.mxu0
    %v272 = vadd.f32 %v166, %v271
    %273 = vmatprep.mubr.f32.mxu0 0.0
    %274 = vmatmul.mubr.f32.gmra.mxu0 %v90
    %v275 = vpop.f32.mrf.mxu0
    %v276 = vadd.f32 %v162, %v275
    %v277 = vpop.f32.mrf.mxu0
    %v278 = vadd.f32 %v166, %v277
    %279 = vmatprep.mubr.f32.mxu0 0.0
    %280 = vmatmul.mubr.f32.gmra.mxu0 %v91
    %v281 = vpop.f32.mrf.mxu0
    %v282 = vadd.f32 %v162, %v281
    %v283 = vpop.f32.mrf.mxu0
    %v284 = vadd.f32 %v166, %v283
    %285 = vmatprep.mubr.f32.mxu0 0.0
    %286 = vmatmul.mubr.f32.gmra.mxu0 %v92
    %v287 = vpop.f32.mrf.mxu0
    %v288 = vadd.f32 %v162, %v287
    %v289 = vpop.f32.mrf.mxu0
    %v290 = vadd.f32 %v166, %v289
    %291 = vdwg.mxu0
    %292 = vmatprep.subr.mxu0 %v156
    %293 = vmatpush1.msra.mxu0 %v155
    %294 = vmatprep.subr.mxu0 %v152
    %295 = vmatpush1.msra.mxu0 %v151
    %296 = vmatprep.subr.mxu0 %v148
    %297 = vmatpush1.msra.mxu0 %v147
    %298 = vmatprep.subr.mxu0 %v144
    %299 = vmatpush1.msra.mxu0 %v143
    %300 = vmatprep.subr.mxu0 %v140
    %301 = vmatpush1.msra.mxu0 %v139
    %302 = vmatprep.subr.mxu0 %v136
    %303 = vmatpush1.msra.mxu0 %v135
    %304 = vmatprep.subr.mxu0 %v132
    %305 = vmatpush1.msra.mxu0 %v131
    %306 = vmatprep.subr.mxu0 %v128
    %307 = vmatpush1.msra.mxu0 %v127
    %308 = vmatprep.subr.mxu0 %v124
    %309 = vmatpush1.msra.mxu0 %v123
    %310 = vmatprep.subr.mxu0 %v120
    %311 = vmatpush1.msra.mxu0 %v119
    %312 = vmatprep.subr.mxu0 %v116
    %313 = vmatpush1.msra.mxu0 %v115
    %314 = vmatprep.subr.mxu0 %v112
    %315 = vmatpush1.msra.mxu0 %v111
    %316 = vmatprep.subr.mxu0 %v108
    %317 = vmatpush1.msra.mxu0 %v107
    %318 = vmatprep.subr.mxu0 %v104
    %319 = vmatpush1.msra.mxu0 %v103
    %320 = vmatprep.subr.mxu0 %v100
    %321 = vmatpush1.msra.mxu0 %v99
    %322 = vmatprep.subr.mxu0 %v96
    %323 = vmatpush1.msra.mxu0 %v95
    %324 = vmatprep.subr.mxu0 0.0
    %325 = vmatpush2.msra.mxu0 0.0
    %326 = vmatprep.subr.mxu0 0.0
    %327 = vmatpush2.msra.mxu0 0.0
    %328 = vmatprep.subr.mxu0 0.0
    %329 = vmatpush2.msra.mxu0 0.0
    %330 = vmatprep.subr.mxu0 0.0
    %331 = vmatpush2.msra.mxu0 0.0
    %332 = vmatprep.subr.mxu0 0.0
    %333 = vmatpush2.msra.mxu0 0.0
    %334 = vmatprep.subr.mxu0 0.0
    %335 = vmatpush2.msra.mxu0 0.0
    %336 = vmatprep.subr.mxu0 0.0
    %337 = vmatpush2.msra.mxu0 0.0
    %338 = vmatprep.subr.mxu0 0.0
    %339 = vmatpush2.msra.mxu0 0.0
    %340 = vmatprep.subr.mxu0 0.0
    %341 = vmatpush2.msra.mxu0 0.0
    %342 = vmatprep.subr.mxu0 0.0
    %343 = vmatpush2.msra.mxu0 0.0
    %344 = vmatprep.subr.mxu0 0.0
    %345 = vmatpush2.msra.mxu0 0.0
    %346 = vmatprep.subr.mxu0 0.0
    %347 = vmatpush2.msra.mxu0 0.0
    %348 = vmatprep.subr.mxu0 0.0
    %349 = vmatpush2.msra.mxu0 0.0
    %350 = vmatprep.subr.mxu0 0.0
    %351 = vmatpush2.msra.mxu0 0.0
    %352 = vmatprep.subr.mxu0 0.0
    %353 = vmatpush2.msra.mxu0 0.0
    %354 = vmatprep.subr.mxu0 0.0
    %355 = vmatpush2.msra.mxu0 0.0
    %356 = vmatprep.mubr.f32.mxu0 0.0
    %357 = vmatmul.mubr.f32.gmra.mxu0 %v85
    %v358 = vpop.f32.mrf.mxu0
    %v359 = vadd.f32 %v170, %v358
    %v360 = vpop.f32.mrf.mxu0
    %v361 = vadd.f32 %v174, %v360
    %362 = vmatprep.mubr.f32.mxu0 0.0
    %363 = vmatmul.mubr.f32.gmra.mxu0 %v86
    %v364 = vpop.f32.mrf.mxu0
    %v365 = vadd.f32 %v170, %v364
    %v366 = vpop.f32.mrf.mxu0
    %v367 = vadd.f32 %v174, %v366
    %368 = vmatprep.mubr.f32.mxu0 0.0
    %369 = vmatmul.mubr.f32.gmra.mxu0 %v87
    %v370 = vpop.f32.mrf.mxu0
    %v371 = vadd.f32 %v170, %v370
    %v372 = vpop.f32.mrf.mxu0
    %v373 = vadd.f32 %v174, %v372
    %374 = vmatprep.mubr.f32.mxu0 0.0
    %375 = vmatmul.mubr.f32.gmra.mxu0 %v88
    %v376 = vpop.f32.mrf.mxu0
    %v377 = vadd.f32 %v170, %v376
    %v378 = vpop.f32.mrf.mxu0
    %v379 = vadd.f32 %v174, %v378
    %380 = vmatprep.mubr.f32.mxu0 0.0
    %381 = vmatmul.mubr.f32.gmra.mxu0 %v89
    %v382 = vpop.f32.mrf.mxu0
    %v383 = vadd.f32 %v170, %v382
    %v384 = vpop.f32.mrf.mxu0
    %v385 = vadd.f32 %v174, %v384
    %386 = vmatprep.mubr.f32.mxu0 0.0
    %387 = vmatmul.mubr.f32.gmra.mxu0 %v90
    %v388 = vpop.f32.mrf.mxu0
    %v389 = vadd.f32 %v170, %v388
    %v390 = vpop.f32.mrf.mxu0
    %v391 = vadd.f32 %v174, %v390
    %392 = vmatprep.mubr.f32.mxu0 0.0
    %393 = vmatmul.mubr.f32.gmra.mxu0 %v91
    %v394 = vpop.f32.mrf.mxu0
    %v395 = vadd.f32 %v170, %v394
    %v396 = vpop.f32.mrf.mxu0
    %v397 = vadd.f32 %v174, %v396
    %398 = vmatprep.mubr.f32.mxu0 0.0
    %399 = vmatmul.mubr.f32.gmra.mxu0 %v92
    %v400 = vpop.f32.mrf.mxu0
    %v401 = vadd.f32 %v170, %v400
    %v402 = vpop.f32.mrf.mxu0
    %v403 = vadd.f32 %v174, %v402
    %404 = vdwg.mxu0
    %405 = vst [vmem:[#allocation2] sm:$0xff] %v246
    %406 = vst [vmem:[#allocation2 + $0x8] sm:$0xff] %v248
    %407 = vst [vmem:[#allocation2 + $0x10] sm:$0xff] %v359
    %408 = vst [vmem:[#allocation2 + $0x18] sm:$0xff] %v361
    %409 = vst [vmem:[#allocation2 + $0x20] sm:$0xff] %v252
    %410 = vst [vmem:[#allocation2 + $0x28] sm:$0xff] %v254
    %411 = vst [vmem:[#allocation2 + $0x30] sm:$0xff] %v365
    %412 = vst [vmem:[#allocation2 + $0x38] sm:$0xff] %v367
    %413 = vst [vmem:[#allocation2 + $0x40] sm:$0xff] %v258
    %414 = vst [vmem:[#allocation2 + $0x48] sm:$0xff] %v260
    %415 = vst [vmem:[#allocation2 + $0x50] sm:$0xff] %v371
    %416 = vst [vmem:[#allocation2 + $0x58] sm:$0xff] %v373
    %417 = vst [vmem:[#allocation2 + $0x60] sm:$0xff] %v264
    %418 = vst [vmem:[#allocation2 + $0x68] sm:$0xff] %v266
    %419 = vst [vmem:[#allocation2 + $0x70] sm:$0xff] %v377
    %420 = vst [vmem:[#allocation2 + $0x78] sm:$0xff] %v379
    %421 = vst [vmem:[#allocation2 + $0x80] sm:$0xff] %v270
    %422 = vst [vmem:[#allocation2 + $0x88] sm:$0xff] %v272
    %423 = vst [vmem:[#allocation2 + $0x90] sm:$0xff] %v383
    %424 = vst [vmem:[#allocation2 + $0x98] sm:$0xff] %v385
    %425 = vst [vmem:[#allocation2 + $0xa0] sm:$0xff] %v276
    %426 = vst [vmem:[#allocation2 + $0xa8] sm:$0xff] %v278
    %427 = vst [vmem:[#allocation2 + $0xb0] sm:$0xff] %v389
    %428 = vst [vmem:[#allocation2 + $0xb8] sm:$0xff] %v391
    %429 = vst [vmem:[#allocation2 + $0xc0] sm:$0xff] %v282
    %430 = vst [vmem:[#allocation2 + $0xc8] sm:$0xff] %v284
    %431 = vst [vmem:[#allocation2 + $0xd0] sm:$0xff] %v395
    %432 = vst [vmem:[#allocation2 + $0xd8] sm:$0xff] %v397
    %433 = vst [vmem:[#allocation2 + $0xe0] sm:$0xff] %v288
    %434 = vst [vmem:[#allocation2 + $0xe8] sm:$0xff] %v290
    %435 = vst [vmem:[#allocation2 + $0xf0] sm:$0xff] %v401
    %436 = vst [vmem:[#allocation2 + $0xf8] sm:$0xff] %v403
    %v437 = vld [vmem:[#allocation3] sm:$0xff]
    %v438 = vld [vmem:[#allocation4] sm:$0xff]
    %s439 = smul.u32 0, 4
    %s440 = smul.addr %s439, 8
    %s441 = scalar_lea.vmem [#allocation2], %s440
    %v442 = vld [vmem:[%s441] sm:$0xff]
    %v443 = vld [vmem:[%s441 + $0x8] sm:$0xff]
    %v444 = vld [vmem:[%s441 + $0x10] sm:$0xff]
    %v445 = vld [vmem:[%s441 + $0x18] sm:$0xff]
    %v446 = vld [vmem:[#allocation10] sm:$0xff]
    %v447 = vld [vmem:[#allocation10 + $0x8] sm:$0xff]
    %v448 = vld [vmem:[#allocation10 + $0x10] sm:$0xff]
    %v449 = vld [vmem:[#allocation10 + $0x18] sm:$0xff]
    %v450 = vld [vmem:[#allocation10 + $0x20] sm:$0xff]
    %v451 = vld [vmem:[#allocation10 + $0x28] sm:$0xff]
    %v452 = vld [vmem:[#allocation10 + $0x30] sm:$0xff]
    %v453 = vld [vmem:[#allocation10 + $0x38] sm:$0xff]
    %v454 = vld [vmem:[#allocation10 + $0x40] sm:$0xff]
    %v455 = vld [vmem:[#allocation10 + $0x48] sm:$0xff]
    %v456 = vld [vmem:[#allocation10 + $0x50] sm:$0xff]
    %v457 = vld [vmem:[#allocation10 + $0x58] sm:$0xff]
    %v458 = vld [vmem:[#allocation10 + $0x60] sm:$0xff]
    %v459 = vld [vmem:[#allocation10 + $0x68] sm:$0xff]
    %v460 = vld [vmem:[#allocation10 + $0x70] sm:$0xff]
    %v461 = vld [vmem:[#allocation10 + $0x78] sm:$0xff]
    %v462 = vld [vmem:[#allocation10 + $0x80] sm:$0xff]
    %v463 = vld [vmem:[#allocation10 + $0x88] sm:$0xff]
    %v464 = vld [vmem:[#allocation10 + $0x90] sm:$0xff]
    %v465 = vld [vmem:[#allocation10 + $0x98] sm:$0xff]
    %v466 = vld [vmem:[#allocation10 + $0xa0] sm:$0xff]
    %v467 = vld [vmem:[#allocation10 + $0xa8] sm:$0xff]
    %v468 = vld [vmem:[#allocation10 + $0xb0] sm:$0xff]
    %v469 = vld [vmem:[#allocation10 + $0xb8] sm:$0xff]
    %v470 = vld [vmem:[#allocation10 + $0xc0] sm:$0xff]
    %v471 = vld [vmem:[#allocation10 + $0xc8] sm:$0xff]
    %v472 = vld [vmem:[#allocation10 + $0xd0] sm:$0xff]
    %v473 = vld [vmem:[#allocation10 + $0xd8] sm:$0xff]
    %v474 = vld [vmem:[#allocation10 + $0xe0] sm:$0xff]
    %v475 = vld [vmem:[#allocation10 + $0xe8] sm:$0xff]
    %v476 = vld [vmem:[#allocation10 + $0xf0] sm:$0xff]
    %v477 = vld [vmem:[#allocation10 + $0xf8] sm:$0xff]
    %v478 = vld [vmem:[#allocation10 + $0x100] sm:$0xff]
    %v479 = vld [vmem:[#allocation10 + $0x108] sm:$0xff]
    %v480 = vld [vmem:[#allocation10 + $0x110] sm:$0xff]
    %v481 = vld [vmem:[#allocation10 + $0x118] sm:$0xff]
    %v482 = vld [vmem:[#allocation10 + $0x120] sm:$0xff]
    %v483 = vld [vmem:[#allocation10 + $0x128] sm:$0xff]
    %v484 = vld [vmem:[#allocation10 + $0x130] sm:$0xff]
    %v485 = vld [vmem:[#allocation10 + $0x138] sm:$0xff]
    %v486 = vld [vmem:[#allocation10 + $0x140] sm:$0xff]
    %v487 = vld [vmem:[#allocation10 + $0x148] sm:$0xff]
    %v488 = vld [vmem:[#allocation10 + $0x150] sm:$0xff]
    %v489 = vld [vmem:[#allocation10 + $0x158] sm:$0xff]
    %v490 = vld [vmem:[#allocation10 + $0x160] sm:$0xff]
    %v491 = vld [vmem:[#allocation10 + $0x168] sm:$0xff]
    %v492 = vld [vmem:[#allocation10 + $0x170] sm:$0xff]
    %v493 = vld [vmem:[#allocation10 + $0x178] sm:$0xff]
    %v494 = vld [vmem:[#allocation10 + $0x180] sm:$0xff]
    %v495 = vld [vmem:[#allocation10 + $0x188] sm:$0xff]
    %v496 = vld [vmem:[#allocation10 + $0x190] sm:$0xff]
    %v497 = vld [vmem:[#allocation10 + $0x198] sm:$0xff]
    %v498 = vld [vmem:[#allocation10 + $0x1a0] sm:$0xff]
    %v499 = vld [vmem:[#allocation10 + $0x1a8] sm:$0xff]
    %v500 = vld [vmem:[#allocation10 + $0x1b0] sm:$0xff]
    %v501 = vld [vmem:[#allocation10 + $0x1b8] sm:$0xff]
    %v502 = vld [vmem:[#allocation10 + $0x1c0] sm:$0xff]
    %v503 = vld [vmem:[#allocation10 + $0x1c8] sm:$0xff]
    %v504 = vld [vmem:[#allocation10 + $0x1d0] sm:$0xff]
    %v505 = vld [vmem:[#allocation10 + $0x1d8] sm:$0xff]
    %v506 = vld [vmem:[#allocation10 + $0x1e0] sm:$0xff]
    %v507 = vld [vmem:[#allocation10 + $0x1e8] sm:$0xff]
    %v508 = vld [vmem:[#allocation10 + $0x1f0] sm:$0xff]
    %v509 = vld [vmem:[#allocation10 + $0x1f8] sm:$0xff]
    %510 = vmatprep.subr.mxu0 %v507
    %511 = vmatpush1.msra.mxu0 %v506
    %512 = vmatprep.subr.mxu0 %v503
    %513 = vmatpush1.msra.mxu0 %v502
    %514 = vmatprep.subr.mxu0 %v499
    %515 = vmatpush1.msra.mxu0 %v498
    %516 = vmatprep.subr.mxu0 %v495
    %517 = vmatpush1.msra.mxu0 %v494
    %518 = vmatprep.subr.mxu0 %v491
    %519 = vmatpush1.msra.mxu0 %v490
    %520 = vmatprep.subr.mxu0 %v487
    %521 = vmatpush1.msra.mxu0 %v486
    %522 = vmatprep.subr.mxu0 %v483
    %523 = vmatpush1.msra.mxu0 %v482
    %524 = vmatprep.subr.mxu0 %v479
    %525 = vmatpush1.msra.mxu0 %v478
    %526 = vmatprep.subr.mxu0 %v475
    %527 = vmatpush1.msra.mxu0 %v474
    %528 = vmatprep.subr.mxu0 %v471
    %529 = vmatpush1.msra.mxu0 %v470
    %530 = vmatprep.subr.mxu0 %v467
    %531 = vmatpush1.msra.mxu0 %v466
    %532 = vmatprep.subr.mxu0 %v463
    %533 = vmatpush1.msra.mxu0 %v462
    %534 = vmatprep.subr.mxu0 %v459
    %535 = vmatpush1.msra.mxu0 %v458
    %536 = vmatprep.subr.mxu0 %v455
    %537 = vmatpush1.msra.mxu0 %v454
    %538 = vmatprep.subr.mxu0 %v451
    %539 = vmatpush1.msra.mxu0 %v450
    %540 = vmatprep.subr.mxu0 %v447
    %541 = vmatpush1.msra.mxu0 %v446
    %542 = vmatprep.subr.mxu0 0.0
    %543 = vmatpush2.msra.mxu0 0.0
    %544 = vmatprep.subr.mxu0 0.0
    %545 = vmatpush2.msra.mxu0 0.0
    %546 = vmatprep.subr.mxu0 0.0
    %547 = vmatpush2.msra.mxu0 0.0
    %548 = vmatprep.subr.mxu0 0.0
    %549 = vmatpush2.msra.mxu0 0.0
    %550 = vmatprep.subr.mxu0 0.0
    %551 = vmatpush2.msra.mxu0 0.0
    %552 = vmatprep.subr.mxu0 0.0
    %553 = vmatpush2.msra.mxu0 0.0
    %554 = vmatprep.subr.mxu0 0.0
    %555 = vmatpush2.msra.mxu0 0.0
    %556 = vmatprep.subr.mxu0 0.0
    %557 = vmatpush2.msra.mxu0 0.0
    %558 = vmatprep.subr.mxu0 0.0
    %559 = vmatpush2.msra.mxu0 0.0
    %560 = vmatprep.subr.mxu0 0.0
    %561 = vmatpush2.msra.mxu0 0.0
    %562 = vmatprep.subr.mxu0 0.0
    %563 = vmatpush2.msra.mxu0 0.0
    %564 = vmatprep.subr.mxu0 0.0
    %565 = vmatpush2.msra.mxu0 0.0
    %566 = vmatprep.subr.mxu0 0.0
    %567 = vmatpush2.msra.mxu0 0.0
    %568 = vmatprep.subr.mxu0 0.0
    %569 = vmatpush2.msra.mxu0 0.0
    %570 = vmatprep.subr.mxu0 0.0
    %571 = vmatpush2.msra.mxu0 0.0
    %572 = vmatprep.subr.mxu0 0.0
    %573 = vmatpush2.msra.mxu0 0.0
    %574 = vmatprep.mubr.f32.mxu0 0.0
    %575 = vmatmul.mubr.f32.gmra.mxu0 %v437
    %v576 = vpop.f32.mrf.mxu0
    %v577 = vadd.f32 0.0, %v576
    %v578 = vpop.f32.mrf.mxu0
    %v579 = vadd.f32 0.0, %v578
    %580 = vdwg.mxu0
    %581 = vmatprep.subr.mxu0 %v509
    %582 = vmatpush1.msra.mxu0 %v508
    %583 = vmatprep.subr.mxu0 %v505
    %584 = vmatpush1.msra.mxu0 %v504
    %585 = vmatprep.subr.mxu0 %v501
    %586 = vmatpush1.msra.mxu0 %v500
    %587 = vmatprep.subr.mxu0 %v497
    %588 = vmatpush1.msra.mxu0 %v496
    %589 = vmatprep.subr.mxu0 %v493
    %590 = vmatpush1.msra.mxu0 %v492
    %591 = vmatprep.subr.mxu0 %v489
    %592 = vmatpush1.msra.mxu0 %v488
    %593 = vmatprep.subr.mxu0 %v485
    %594 = vmatpush1.msra.mxu0 %v484
    %595 = vmatprep.subr.mxu0 %v481
    %596 = vmatpush1.msra.mxu0 %v480
    %597 = vmatprep.subr.mxu0 %v477
    %598 = vmatpush1.msra.mxu0 %v476
    %599 = vmatprep.subr.mxu0 %v473
    %600 = vmatpush1.msra.mxu0 %v472
    %601 = vmatprep.subr.mxu0 %v469
    %602 = vmatpush1.msra.mxu0 %v468
    %603 = vmatprep.subr.mxu0 %v465
    %604 = vmatpush1.msra.mxu0 %v464
    %605 = vmatprep.subr.mxu0 %v461
    %606 = vmatpush1.msra.mxu0 %v460
    %607 = vmatprep.subr.mxu0 %v457
    %608 = vmatpush1.msra.mxu0 %v456
    %609 = vmatprep.subr.mxu0 %v453
    %610 = vmatpush1.msra.mxu0 %v452
    %611 = vmatprep.subr.mxu0 %v449
    %612 = vmatpush1.msra.mxu0 %v448
    %613 = vmatprep.subr.mxu0 0.0
    %614 = vmatpush2.msra.mxu0 0.0
    %615 = vmatprep.subr.mxu0 0.0
    %616 = vmatpush2.msra.mxu0 0.0
    %617 = vmatprep.subr.mxu0 0.0
    %618 = vmatpush2.msra.mxu0 0.0
    %619 = vmatprep.subr.mxu0 0.0
    %620 = vmatpush2.msra.mxu0 0.0
    %621 = vmatprep.subr.mxu0 0.0
    %622 = vmatpush2.msra.mxu0 0.0
    %623 = vmatprep.subr.mxu0 0.0
    %624 = vmatpush2.msra.mxu0 0.0
    %625 = vmatprep.subr.mxu0 0.0
    %626 = vmatpush2.msra.mxu0 0.0
    %627 = vmatprep.subr.mxu0 0.0
    %628 = vmatpush2.msra.mxu0 0.0
    %629 = vmatprep.subr.mxu0 0.0
    %630 = vmatpush2.msra.mxu0 0.0
    %631 = vmatprep.subr.mxu0 0.0
    %632 = vmatpush2.msra.mxu0 0.0
    %633 = vmatprep.subr.mxu0 0.0
    %634 = vmatpush2.msra.mxu0 0.0
    %635 = vmatprep.subr.mxu0 0.0
    %636 = vmatpush2.msra.mxu0 0.0
    %637 = vmatprep.subr.mxu0 0.0
    %638 = vmatpush2.msra.mxu0 0.0
    %639 = vmatprep.subr.mxu0 0.0
    %640 = vmatpush2.msra.mxu0 0.0
    %641 = vmatprep.subr.mxu0 0.0
    %642 = vmatpush2.msra.mxu0 0.0
    %643 = vmatprep.subr.mxu0 0.0
    %644 = vmatpush2.msra.mxu0 0.0
    %645 = vmatprep.mubr.f32.mxu0 0.0
    %646 = vmatmul.mubr.f32.gmra.mxu0 %v437
    %v647 = vpop.f32.mrf.mxu0
    %v648 = vadd.f32 0.0, %v647
    %v649 = vpop.f32.mrf.mxu0
    %v650 = vadd.f32 0.0, %v649
    %651 = vdwg.mxu0
    %v652 = vadd.f32 %v442, %v577
    %v653 = vadd.f32 %v443, %v579
    %v654 = vadd.f32 %v444, %v648
    %v655 = vadd.f32 %v445, %v650
    %v656 = vmul.f32 %v652, 0.5
    %v657 = vmul.f32 %v653, 0.5
    %v658 = vtanh.pop %v656
    %v659 = vtanh.pop %v657
    %v660 = vmul.f32 %v658, 0.5
    %v661 = vmul.f32 %v659, 0.5
    %v662 = vadd.f32 %v660, 0.5
    %v663 = vadd.f32 %v661, 0.5
    %v664 = vtanh.pop %v654
    %v665 = vmul.f32 %v655, 0.5
    %v666 = vtanh.pop %v665
    %v667 = vmul.f32 %v666, 0.5
    %v668 = vadd.f32 %v667, 0.5
    %v669 = vmul.f32 %v663, %v438
    %v670 = vmul.f32 %v662, %v664
    %v671 = vadd.f32 %v669, %v670
    %v672 = vtanh.pop %v671
    %v673 = vmul.f32 %v668, %v672
    %s674 = smul.u32 1, 4
    %s675 = smul.addr %s674, 8
    %s676 = scalar_lea.vmem [#allocation2], %s675
    %v677 = vld [vmem:[%s676] sm:$0xff]
    %v678 = vld [vmem:[%s676 + $0x8] sm:$0xff]
    %v679 = vld [vmem:[%s676 + $0x10] sm:$0xff]
    %v680 = vld [vmem:[%s676 + $0x18] sm:$0xff]
    %681 = vmatprep.subr.mxu0 %v507
    %682 = vmatpush1.msra.mxu0 %v506
    %683 = vmatprep.subr.mxu0 %v503
    %684 = vmatpush1.msra.mxu0 %v502
    %685 = vmatprep.subr.mxu0 %v499
    %686 = vmatpush1.msra.mxu0 %v498
    %687 = vmatprep.subr.mxu0 %v495
    %688 = vmatpush1.msra.mxu0 %v494
    %689 = vmatprep.subr.mxu0 %v491
    %690 = vmatpush1.msra.mxu0 %v490
    %691 = vmatprep.subr.mxu0 %v487
    %692 = vmatpush1.msra.mxu0 %v486
    %693 = vmatprep.subr.mxu0 %v483
    %694 = vmatpush1.msra.mxu0 %v482
    %695 = vmatprep.subr.mxu0 %v479
    %696 = vmatpush1.msra.mxu0 %v478
    %697 = vmatprep.subr.mxu0 %v475
    %698 = vmatpush1.msra.mxu0 %v474
    %699 = vmatprep.subr.mxu0 %v471
    %700 = vmatpush1.msra.mxu0 %v470
    %701 = vmatprep.subr.mxu0 %v467
    %702 = vmatpush1.msra.mxu0 %v466
    %703 = vmatprep.subr.mxu0 %v463
    %704 = vmatpush1.msra.mxu0 %v462
    %705 = vmatprep.subr.mxu0 %v459
    %706 = vmatpush1.msra.mxu0 %v458
    %707 = vmatprep.subr.mxu0 %v455
    %708 = vmatpush1.msra.mxu0 %v454
    %709 = vmatprep.subr.mxu0 %v451
    %710 = vmatpush1.msra.mxu0 %v450
    %711 = vmatprep.subr.mxu0 %v447
    %712 = vmatpush1.msra.mxu0 %v446
    %713 = vmatprep.subr.mxu0 0.0
    %714 = vmatpush2.msra.mxu0 0.0
    %715 = vmatprep.subr.mxu0 0.0
    %716 = vmatpush2.msra.mxu0 0.0
    %717 = vmatprep.subr.mxu0 0.0
    %718 = vmatpush2.msra.mxu0 0.0
    %719 = vmatprep.subr.mxu0 0.0
    %720 = vmatpush2.msra.mxu0 0.0
    %721 = vmatprep.subr.mxu0 0.0
    %722 = vmatpush2.msra.mxu0 0.0
    %723 = vmatprep.subr.mxu0 0.0
    %724 = vmatpush2.msra.mxu0 0.0
    %725 = vmatprep.subr.mxu0 0.0
    %726 = vmatpush2.msra.mxu0 0.0
    %727 = vmatprep.subr.mxu0 0.0
    %728 = vmatpush2.msra.mxu0 0.0
    %729 = vmatprep.subr.mxu0 0.0
    %730 = vmatpush2.msra.mxu0 0.0
    %731 = vmatprep.subr.mxu0 0.0
    %732 = vmatpush2.msra.mxu0 0.0
    %733 = vmatprep.subr.mxu0 0.0
    %734 = vmatpush2.msra.mxu0 0.0
    %735 = vmatprep.subr.mxu0 0.0
    %736 = vmatpush2.msra.mxu0 0.0
    %737 = vmatprep.subr.mxu0 0.0
    %738 = vmatpush2.msra.mxu0 0.0
    %739 = vmatprep.subr.mxu0 0.0
    %740 = vmatpush2.msra.mxu0 0.0
    %741 = vmatprep.subr.mxu0 0.0
    %742 = vmatpush2.msra.mxu0 0.0
    %743 = vmatprep.subr.mxu0 0.0
    %744 = vmatpush2.msra.mxu0 0.0
    %745 = vmatprep.mubr.f32.mxu0 0.0
    %746 = vmatmul.mubr.f32.gmra.mxu0 %v673
    %v747 = vpop.f32.mrf.mxu0
    %v748 = vadd.f32 0.0, %v747
    %v749 = vpop.f32.mrf.mxu0
    %v750 = vadd.f32 0.0, %v749
    %751 = vdwg.mxu0
    %752 = vmatprep.subr.mxu0 %v509
    %753 = vmatpush1.msra.mxu0 %v508
    %754 = vmatprep.subr.mxu0 %v505
    %755 = vmatpush1.msra.mxu0 %v504
    %756 = vmatprep.subr.mxu0 %v501
    %757 = vmatpush1.msra.mxu0 %v500
    %758 = vmatprep.subr.mxu0 %v497
    %759 = vmatpush1.msra.mxu0 %v496
    %760 = vmatprep.subr.mxu0 %v493
    %761 = vmatpush1.msra.mxu0 %v492
    %762 = vmatprep.subr.mxu0 %v489
    %763 = vmatpush1.msra.mxu0 %v488
    %764 = vmatprep.subr.mxu0 %v485
    %765 = vmatpush1.msra.mxu0 %v484
    %766 = vmatprep.subr.mxu0 %v481
    %767 = vmatpush1.msra.mxu0 %v480
    %768 = vmatprep.subr.mxu0 %v477
    %769 = vmatpush1.msra.mxu0 %v476
    %770 = vmatprep.subr.mxu0 %v473
    %771 = vmatpush1.msra.mxu0 %v472
    %772 = vmatprep.subr.mxu0 %v469
    %773 = vmatpush1.msra.mxu0 %v468
    %774 = vmatprep.subr.mxu0 %v465
    %775 = vmatpush1.msra.mxu0 %v464
    %776 = vmatprep.subr.mxu0 %v461
    %777 = vmatpush1.msra.mxu0 %v460
    %778 = vmatprep.subr.mxu0 %v457
    %779 = vmatpush1.msra.mxu0 %v456
    %780 = vmatprep.subr.mxu0 %v453
    %781 = vmatpush1.msra.mxu0 %v452
    %782 = vmatprep.subr.mxu0 %v449
    %783 = vmatpush1.msra.mxu0 %v448
    %784 = vmatprep.subr.mxu0 0.0
    %785 = vmatpush2.msra.mxu0 0.0
    %786 = vmatprep.subr.mxu0 0.0
    %787 = vmatpush2.msra.mxu0 0.0
    %788 = vmatprep.subr.mxu0 0.0
    %789 = vmatpush2.msra.mxu0 0.0
    %790 = vmatprep.subr.mxu0 0.0
    %791 = vmatpush2.msra.mxu0 0.0
    %792 = vmatprep.subr.mxu0 0.0
    %793 = vmatpush2.msra.mxu0 0.0
    %794 = vmatprep.subr.mxu0 0.0
    %795 = vmatpush2.msra.mxu0 0.0
    %796 = vmatprep.subr.mxu0 0.0
    %797 = vmatpush2.msra.mxu0 0.0
    %798 = vmatprep.subr.mxu0 0.0
    %799 = vmatpush2.msra.mxu0 0.0
    %800 = vmatprep.subr.mxu0 0.0
    %801 = vmatpush2.msra.mxu0 0.0
    %802 = vmatprep.subr.mxu0 0.0
    %803 = vmatpush2.msra.mxu0 0.0
    %804 = vmatprep.subr.mxu0 0.0
    %805 = vmatpush2.msra.mxu0 0.0
    %806 = vmatprep.subr.mxu0 0.0
    %807 = vmatpush2.msra.mxu0 0.0
    %808 = vmatprep.subr.mxu0 0.0
    %809 = vmatpush2.msra.mxu0 0.0
    %810 = vmatprep.subr.mxu0 0.0
    %811 = vmatpush2.msra.mxu0 0.0
    %812 = vmatprep.subr.mxu0 0.0
    %813 = vmatpush2.msra.mxu0 0.0
    %814 = vmatprep.subr.mxu0 0.0
    %815 = vmatpush2.msra.mxu0 0.0
    %816 = vmatprep.mubr.f32.mxu0 0.0
    %817 = vmatmul.mubr.f32.gmra.mxu0 %v673
    %v818 = vpop.f32.mrf.mxu0
    %v819 = vadd.f32 0.0, %v818
    %v820 = vpop.f32.mrf.mxu0
    %v821 = vadd.f32 0.0, %v820
    %822 = vdwg.mxu0
    %v823 = vadd.f32 %v677, %v748
    %v824 = vadd.f32 %v678, %v750
    %v825 = vadd.f32 %v679, %v819
    %v826 = vadd.f32 %v680, %v821
    %v827 = vmul.f32 %v823, 0.5
    %v828 = vmul.f32 %v824, 0.5
    %v829 = vtanh.pop %v827
    %v830 = vtanh.pop %v828
    %v831 = vmul.f32 %v829, 0.5
    %v832 = vmul.f32 %v830, 0.5
    %v833 = vadd.f32 %v831, 0.5
    %v834 = vadd.f32 %v832, 0.5
    %v835 = vtanh.pop %v825
    %v836 = vmul.f32 %v826, 0.5
    %v837 = vtanh.pop %v836
    %v838 = vmul.f32 %v837, 0.5
    %v839 = vadd.f32 %v838, 0.5
    %v840 = vmul.f32 %v834, %v671
    %v841 = vmul.f32 %v833, %v835
    %v842 = vadd.f32 %v840, %v841
    %v843 = vtanh.pop %v842
    %v844 = vmul.f32 %v839, %v843
    %s845 = smul.u32 2, 4
    %s846 = smul.addr %s845, 8
    %s847 = scalar_lea.vmem [#allocation2], %s846
    %v848 = vld [vmem:[%s847] sm:$0xff]
    %v849 = vld [vmem:[%s847 + $0x8] sm:$0xff]
    %v850 = vld [vmem:[%s847 + $0x10] sm:$0xff]
    %v851 = vld [vmem:[%s847 + $0x18] sm:$0xff]
    %852 = vmatprep.subr.mxu0 %v507
    %853 = vmatpush1.msra.mxu0 %v506
    %854 = vmatprep.subr.mxu0 %v503
    %855 = vmatpush1.msra.mxu0 %v502
    %856 = vmatprep.subr.mxu0 %v499
    %857 = vmatpush1.msra.mxu0 %v498
    %858 = vmatprep.subr.mxu0 %v495
    %859 = vmatpush1.msra.mxu0 %v494
    %860 = vmatprep.subr.mxu0 %v491
    %861 = vmatpush1.msra.mxu0 %v490
    %862 = vmatprep.subr.mxu0 %v487
    %863 = vmatpush1.msra.mxu0 %v486
    %864 = vmatprep.subr.mxu0 %v483
    %865 = vmatpush1.msra.mxu0 %v482
    %866 = vmatprep.subr.mxu0 %v479
    %867 = vmatpush1.msra.mxu0 %v478
    %868 = vmatprep.subr.mxu0 %v475
    %869 = vmatpush1.msra.mxu0 %v474
    %870 = vmatprep.subr.mxu0 %v471
    %871 = vmatpush1.msra.mxu0 %v470
    %872 = vmatprep.subr.mxu0 %v467
    %873 = vmatpush1.msra.mxu0 %v466
    %874 = vmatprep.subr.mxu0 %v463
    %875 = vmatpush1.msra.mxu0 %v462
    %876 = vmatprep.subr.mxu0 %v459
    %877 = vmatpush1.msra.mxu0 %v458
    %878 = vmatprep.subr.mxu0 %v455
    %879 = vmatpush1.msra.mxu0 %v454
    %880 = vmatprep.subr.mxu0 %v451
    %881 = vmatpush1.msra.mxu0 %v450
    %882 = vmatprep.subr.mxu0 %v447
    %883 = vmatpush1.msra.mxu0 %v446
    %884 = vmatprep.subr.mxu0 0.0
    %885 = vmatpush2.msra.mxu0 0.0
    %886 = vmatprep.subr.mxu0 0.0
    %887 = vmatpush2.msra.mxu0 0.0
    %888 = vmatprep.subr.mxu0 0.0
    %889 = vmatpush2.msra.mxu0 0.0
    %890 = vmatprep.subr.mxu0 0.0
    %891 = vmatpush2.msra.mxu0 0.0
    %892 = vmatprep.subr.mxu0 0.0
    %893 = vmatpush2.msra.mxu0 0.0
    %894 = vmatprep.subr.mxu0 0.0
    %895 = vmatpush2.msra.mxu0 0.0
    %896 = vmatprep.subr.mxu0 0.0
    %897 = vmatpush2.msra.mxu0 0.0
    %898 = vmatprep.subr.mxu0 0.0
    %899 = vmatpush2.msra.mxu0 0.0
    %900 = vmatprep.subr.mxu0 0.0
    %901 = vmatpush2.msra.mxu0 0.0
    %902 = vmatprep.subr.mxu0 0.0
    %903 = vmatpush2.msra.mxu0 0.0
    %904 = vmatprep.subr.mxu0 0.0
    %905 = vmatpush2.msra.mxu0 0.0
    %906 = vmatprep.subr.mxu0 0.0
    %907 = vmatpush2.msra.mxu0 0.0
    %908 = vmatprep.subr.mxu0 0.0
    %909 = vmatpush2.msra.mxu0 0.0
    %910 = vmatprep.subr.mxu0 0.0
    %911 = vmatpush2.msra.mxu0 0.0
    %912 = vmatprep.subr.mxu0 0.0
    %913 = vmatpush2.msra.mxu0 0.0
    %914 = vmatprep.subr.mxu0 0.0
    %915 = vmatpush2.msra.mxu0 0.0
    %916 = vmatprep.mubr.f32.mxu0 0.0
    %917 = vmatmul.mubr.f32.gmra.mxu0 %v844
    %v918 = vpop.f32.mrf.mxu0
    %v919 = vadd.f32 0.0, %v918
    %v920 = vpop.f32.mrf.mxu0
    %v921 = vadd.f32 0.0, %v920
    %922 = vdwg.mxu0
    %923 = vmatprep.subr.mxu0 %v509
    %924 = vmatpush1.msra.mxu0 %v508
    %925 = vmatprep.subr.mxu0 %v505
    %926 = vmatpush1.msra.mxu0 %v504
    %927 = vmatprep.subr.mxu0 %v501
    %928 = vmatpush1.msra.mxu0 %v500
    %929 = vmatprep.subr.mxu0 %v497
    %930 = vmatpush1.msra.mxu0 %v496
    %931 = vmatprep.subr.mxu0 %v493
    %932 = vmatpush1.msra.mxu0 %v492
    %933 = vmatprep.subr.mxu0 %v489
    %934 = vmatpush1.msra.mxu0 %v488
    %935 = vmatprep.subr.mxu0 %v485
    %936 = vmatpush1.msra.mxu0 %v484
    %937 = vmatprep.subr.mxu0 %v481
    %938 = vmatpush1.msra.mxu0 %v480
    %939 = vmatprep.subr.mxu0 %v477
    %940 = vmatpush1.msra.mxu0 %v476
    %941 = vmatprep.subr.mxu0 %v473
    %942 = vmatpush1.msra.mxu0 %v472
    %943 = vmatprep.subr.mxu0 %v469
    %944 = vmatpush1.msra.mxu0 %v468
    %945 = vmatprep.subr.mxu0 %v465
    %946 = vmatpush1.msra.mxu0 %v464
    %947 = vmatprep.subr.mxu0 %v461
    %948 = vmatpush1.msra.mxu0 %v460
    %949 = vmatprep.subr.mxu0 %v457
    %950 = vmatpush1.msra.mxu0 %v456
    %951 = vmatprep.subr.mxu0 %v453
    %952 = vmatpush1.msra.mxu0 %v452
    %953 = vmatprep.subr.mxu0 %v449
    %954 = vmatpush1.msra.mxu0 %v448
    %955 = vmatprep.subr.mxu0 0.0
    %956 = vmatpush2.msra.mxu0 0.0
    %957 = vmatprep.subr.mxu0 0.0
    %958 = vmatpush2.msra.mxu0 0.0
    %959 = vmatprep.subr.mxu0 0.0
    %960 = vmatpush2.msra.mxu0 0.0
    %961 = vmatprep.subr.mxu0 0.0
    %962 = vmatpush2.msra.mxu0 0.0
    %963 = vmatprep.subr.mxu0 0.0
    %964 = vmatpush2.msra.mxu0 0.0
    %965 = vmatprep.subr.mxu0 0.0
    %966 = vmatpush2.msra.mxu0 0.0
    %967 = vmatprep.subr.mxu0 0.0
    %968 = vmatpush2.msra.mxu0 0.0
    %969 = vmatprep.subr.mxu0 0.0
    %970 = vmatpush2.msra.mxu0 0.0
    %971 = vmatprep.subr.mxu0 0.0
    %972 = vmatpush2.msra.mxu0 0.0
    %973 = vmatprep.subr.mxu0 0.0
    %974 = vmatpush2.msra.mxu0 0.0
    %975 = vmatprep.subr.mxu0 0.0
    %976 = vmatpush2.msra.mxu0 0.0
    %977 = vmatprep.subr.mxu0 0.0
    %978 = vmatpush2.msra.mxu0 0.0
    %979 = vmatprep.subr.mxu0 0.0
    %980 = vmatpush2.msra.mxu0 0.0
    %981 = vmatprep.subr.mxu0 0.0
    %982 = vmatpush2.msra.mxu0 0.0
    %983 = vmatprep.subr.mxu0 0.0
    %984 = vmatpush2.msra.mxu0 0.0
    %985 = vmatprep.subr.mxu0 0.0
    %986 = vmatpush2.msra.mxu0 0.0
    %987 = vmatprep.mubr.f32.mxu0 0.0
    %988 = vmatmul.mubr.f32.gmra.mxu0 %v844
    %v989 = vpop.f32.mrf.mxu0
    %v990 = vadd.f32 0.0, %v989
    %v991 = vpop.f32.mrf.mxu0
    %v992 = vadd.f32 0.0, %v991
    %993 = vdwg.mxu0
    %v994 = vadd.f32 %v848, %v919
    %v995 = vadd.f32 %v849, %v921
    %v996 = vadd.f32 %v850, %v990
    %v997 = vadd.f32 %v851, %v992
    %v998 = vmul.f32 %v994, 0.5
    %v999 = vmul.f32 %v995, 0.5
    %v1000 = vtanh.pop %v998
    %v1001 = vtanh.pop %v999
    %v1002 = vmul.f32 %v1000, 0.5
    %v1003 = vmul.f32 %v1001, 0.5
    %v1004 = vadd.f32 %v1002, 0.5
    %v1005 = vadd.f32 %v1003, 0.5
    %v1006 = vtanh.pop %v996
    %v1007 = vmul.f32 %v997, 0.5
    %v1008 = vtanh.pop %v1007
    %v1009 = vmul.f32 %v1008, 0.5
    %v1010 = vadd.f32 %v1009, 0.5
    %v1011 = vmul.f32 %v1005, %v842
    %v1012 = vmul.f32 %v1004, %v1006
    %v1013 = vadd.f32 %v1011, %v1012
    %v1014 = vtanh.pop %v1013
    %v1015 = vmul.f32 %v1010, %v1014
    %s1016 = smul.u32 3, 4
    %s1017 = smul.addr %s1016, 8
    %s1018 = scalar_lea.vmem [#allocation2], %s1017
    %v1019 = vld [vmem:[%s1018] sm:$0xff]
    %v1020 = vld [vmem:[%s1018 + $0x8] sm:$0xff]
    %v1021 = vld [vmem:[%s1018 + $0x10] sm:$0xff]
    %v1022 = vld [vmem:[%s1018 + $0x18] sm:$0xff]
    %1023 = vmatprep.subr.mxu0 %v507
    %1024 = vmatpush1.msra.mxu0 %v506
    %1025 = vmatprep.subr.mxu0 %v503
    %1026 = vmatpush1.msra.mxu0 %v502
    %1027 = vmatprep.subr.mxu0 %v499
    %1028 = vmatpush1.msra.mxu0 %v498
    %1029 = vmatprep.subr.mxu0 %v495
    %1030 = vmatpush1.msra.mxu0 %v494
    %1031 = vmatprep.subr.mxu0 %v491
    %1032 = vmatpush1.msra.mxu0 %v490
    %1033 = vmatprep.subr.mxu0 %v487
    %1034 = vmatpush1.msra.mxu0 %v486
    %1035 = vmatprep.subr.mxu0 %v483
    %1036 = vmatpush1.msra.mxu0 %v482
    %1037 = vmatprep.subr.mxu0 %v479
    %1038 = vmatpush1.msra.mxu0 %v478
    %1039 = vmatprep.subr.mxu0 %v475
    %1040 = vmatpush1.msra.mxu0 %v474
    %1041 = vmatprep.subr.mxu0 %v471
    %1042 = vmatpush1.msra.mxu0 %v470
    %1043 = vmatprep.subr.mxu0 %v467
    %1044 = vmatpush1.msra.mxu0 %v466
    %1045 = vmatprep.subr.mxu0 %v463
    %1046 = vmatpush1.msra.mxu0 %v462
    %1047 = vmatprep.subr.mxu0 %v459
    %1048 = vmatpush1.msra.mxu0 %v458
    %1049 = vmatprep.subr.mxu0 %v455
    %1050 = vmatpush1.msra.mxu0 %v454
    %1051 = vmatprep.subr.mxu0 %v451
    %1052 = vmatpush1.msra.mxu0 %v450
    %1053 = vmatprep.subr.mxu0 %v447
    %1054 = vmatpush1.msra.mxu0 %v446
    %1055 = vmatprep.subr.mxu0 0.0
    %1056 = vmatpush2.msra.mxu0 0.0
    %1057 = vmatprep.subr.mxu0 0.0
    %1058 = vmatpush2.msra.mxu0 0.0
    %1059 = vmatprep.subr.mxu0 0.0
    %1060 = vmatpush2.msra.mxu0 0.0
    %1061 = vmatprep.subr.mxu0 0.0
    %1062 = vmatpush2.msra.mxu0 0.0
    %1063 = vmatprep.subr.mxu0 0.0
    %1064 = vmatpush2.msra.mxu0 0.0
    %1065 = vmatprep.subr.mxu0 0.0
    %1066 = vmatpush2.msra.mxu0 0.0
    %1067 = vmatprep.subr.mxu0 0.0
    %1068 = vmatpush2.msra.mxu0 0.0
    %1069 = vmatprep.subr.mxu0 0.0
    %1070 = vmatpush2.msra.mxu0 0.0
    %1071 = vmatprep.subr.mxu0 0.0
    %1072 = vmatpush2.msra.mxu0 0.0
    %1073 = vmatprep.subr.mxu0 0.0
    %1074 = vmatpush2.msra.mxu0 0.0
    %1075 = vmatprep.subr.mxu0 0.0
    %1076 = vmatpush2.msra.mxu0 0.0
    %1077 = vmatprep.subr.mxu0 0.0
    %1078 = vmatpush2.msra.mxu0 0.0
    %1079 = vmatprep.subr.mxu0 0.0
    %1080 = vmatpush2.msra.mxu0 0.0
    %1081 = vmatprep.subr.mxu0 0.0
    %1082 = vmatpush2.msra.mxu0 0.0
    %1083 = vmatprep.subr.mxu0 0.0
    %1084 = vmatpush2.msra.mxu0 0.0
    %1085 = vmatprep.subr.mxu0 0.0
    %1086 = vmatpush2.msra.mxu0 0.0
    %1087 = vmatprep.mubr.f32.mxu0 0.0
    %1088 = vmatmul.mubr.f32.gmra.mxu0 %v1015
    %v1089 = vpop.f32.mrf.mxu0
    %v1090 = vadd.f32 0.0, %v1089
    %v1091 = vpop.f32.mrf.mxu0
    %v1092 = vadd.f32 0.0, %v1091
    %1093 = vdwg.mxu0
    %1094 = vmatprep.subr.mxu0 %v509
    %1095 = vmatpush1.msra.mxu0 %v508
    %1096 = vmatprep.subr.mxu0 %v505
    %1097 = vmatpush1.msra.mxu0 %v504
    %1098 = vmatprep.subr.mxu0 %v501
    %1099 = vmatpush1.msra.mxu0 %v500
    %1100 = vmatprep.subr.mxu0 %v497
    %1101 = vmatpush1.msra.mxu0 %v496
    %1102 = vmatprep.subr.mxu0 %v493
    %1103 = vmatpush1.msra.mxu0 %v492
    %1104 = vmatprep.subr.mxu0 %v489
    %1105 = vmatpush1.msra.mxu0 %v488
    %1106 = vmatprep.subr.mxu0 %v485
    %1107 = vmatpush1.msra.mxu0 %v484
    %1108 = vmatprep.subr.mxu0 %v481
    %1109 = vmatpush1.msra.mxu0 %v480
    %1110 = vmatprep.subr.mxu0 %v477
    %1111 = vmatpush1.msra.mxu0 %v476
    %1112 = vmatprep.subr.mxu0 %v473
    %1113 = vmatpush1.msra.mxu0 %v472
    %1114 = vmatprep.subr.mxu0 %v469
    %1115 = vmatpush1.msra.mxu0 %v468
    %1116 = vmatprep.subr.mxu0 %v465
    %1117 = vmatpush1.msra.mxu0 %v464
    %1118 = vmatprep.subr.mxu0 %v461
    %1119 = vmatpush1.msra.mxu0 %v460
    %1120 = vmatprep.subr.mxu0 %v457
    %1121 = vmatpush1.msra.mxu0 %v456
    %1122 = vmatprep.subr.mxu0 %v453
    %1123 = vmatpush1.msra.mxu0 %v452
    %1124 = vmatprep.subr.mxu0 %v449
    %1125 = vmatpush1.msra.mxu0 %v448
    %1126 = vmatprep.subr.mxu0 0.0
    %1127 = vmatpush2.msra.mxu0 0.0
    %1128 = vmatprep.subr.mxu0 0.0
    %1129 = vmatpush2.msra.mxu0 0.0
    %1130 = vmatprep.subr.mxu0 0.0
    %1131 = vmatpush2.msra.mxu0 0.0
    %1132 = vmatprep.subr.mxu0 0.0
    %1133 = vmatpush2.msra.mxu0 0.0
    %1134 = vmatprep.subr.mxu0 0.0
    %1135 = vmatpush2.msra.mxu0 0.0
    %1136 = vmatprep.subr.mxu0 0.0
    %1137 = vmatpush2.msra.mxu0 0.0
    %1138 = vmatprep.subr.mxu0 0.0
    %1139 = vmatpush2.msra.mxu0 0.0
    %1140 = vmatprep.subr.mxu0 0.0
    %1141 = vmatpush2.msra.mxu0 0.0
    %1142 = vmatprep.subr.mxu0 0.0
    %1143 = vmatpush2.msra.mxu0 0.0
    %1144 = vmatprep.subr.mxu0 0.0
    %1145 = vmatpush2.msra.mxu0 0.0
    %1146 = vmatprep.subr.mxu0 0.0
    %1147 = vmatpush2.msra.mxu0 0.0
    %1148 = vmatprep.subr.mxu0 0.0
    %1149 = vmatpush2.msra.mxu0 0.0
    %1150 = vmatprep.subr.mxu0 0.0
    %1151 = vmatpush2.msra.mxu0 0.0
    %1152 = vmatprep.subr.mxu0 0.0
    %1153 = vmatpush2.msra.mxu0 0.0
    %1154 = vmatprep.subr.mxu0 0.0
    %1155 = vmatpush2.msra.mxu0 0.0
    %1156 = vmatprep.subr.mxu0 0.0
    %1157 = vmatpush2.msra.mxu0 0.0
    %1158 = vmatprep.mubr.f32.mxu0 0.0
    %1159 = vmatmul.mubr.f32.gmra.mxu0 %v1015
    %v1160 = vpop.f32.mrf.mxu0
    %v1161 = vadd.f32 0.0, %v1160
    %v1162 = vpop.f32.mrf.mxu0
    %v1163 = vadd.f32 0.0, %v1162
    %1164 = vdwg.mxu0
    %v1165 = vadd.f32 %v1019, %v1090
    %v1166 = vadd.f32 %v1020, %v1092
    %v1167 = vadd.f32 %v1021, %v1161
    %v1168 = vadd.f32 %v1022, %v1163
    %v1169 = vmul.f32 %v1165, 0.5
    %v1170 = vmul.f32 %v1166, 0.5
    %v1171 = vtanh.pop %v1169
    %v1172 = vtanh.pop %v1170
    %v1173 = vmul.f32 %v1171, 0.5
    %v1174 = vmul.f32 %v1172, 0.5
    %v1175 = vadd.f32 %v1173, 0.5
    %v1176 = vadd.f32 %v1174, 0.5
    %v1177 = vtanh.pop %v1167
    %v1178 = vmul.f32 %v1168, 0.5
    %v1179 = vtanh.pop %v1178
    %v1180 = vmul.f32 %v1179, 0.5
    %v1181 = vadd.f32 %v1180, 0.5
    %v1182 = vmul.f32 %v1176, %v1013
    %v1183 = vmul.f32 %v1175, %v1177
    %v1184 = vadd.f32 %v1182, %v1183
    %v1185 = vtanh.pop %v1184
    %v1186 = vmul.f32 %v1181, %v1185
    %s1187 = smul.u32 4, 4
    %s1188 = smul.addr %s1187, 8
    %s1189 = scalar_lea.vmem [#allocation2], %s1188
    %v1190 = vld [vmem:[%s1189] sm:$0xff]
    %v1191 = vld [vmem:[%s1189 + $0x8] sm:$0xff]
    %v1192 = vld [vmem:[%s1189 + $0x10] sm:$0xff]
    %v1193 = vld [vmem:[%s1189 + $0x18] sm:$0xff]
    %1194 = vmatprep.subr.mxu0 %v507
    %1195 = vmatpush1.msra.mxu0 %v506
    %1196 = vmatprep.subr.mxu0 %v503
    %1197 = vmatpush1.msra.mxu0 %v502
    %1198 = vmatprep.subr.mxu0 %v499
    %1199 = vmatpush1.msra.mxu0 %v498
    %1200 = vmatprep.subr.mxu0 %v495
    %1201 = vmatpush1.msra.mxu0 %v494
    %1202 = vmatprep.subr.mxu0 %v491
    %1203 = vmatpush1.msra.mxu0 %v490
    %1204 = vmatprep.subr.mxu0 %v487
    %1205 = vmatpush1.msra.mxu0 %v486
    %1206 = vmatprep.subr.mxu0 %v483
    %1207 = vmatpush1.msra.mxu0 %v482
    %1208 = vmatprep.subr.mxu0 %v479
    %1209 = vmatpush1.msra.mxu0 %v478
    %1210 = vmatprep.subr.mxu0 %v475
    %1211 = vmatpush1.msra.mxu0 %v474
    %1212 = vmatprep.subr.mxu0 %v471
    %1213 = vmatpush1.msra.mxu0 %v470
    %1214 = vmatprep.subr.mxu0 %v467
    %1215 = vmatpush1.msra.mxu0 %v466
    %1216 = vmatprep.subr.mxu0 %v463
    %1217 = vmatpush1.msra.mxu0 %v462
    %1218 = vmatprep.subr.mxu0 %v459
    %1219 = vmatpush1.msra.mxu0 %v458
    %1220 = vmatprep.subr.mxu0 %v455
    %1221 = vmatpush1.msra.mxu0 %v454
    %1222 = vmatprep.subr.mxu0 %v451
    %1223 = vmatpush1.msra.mxu0 %v450
    %1224 = vmatprep.subr.mxu0 %v447
    %1225 = vmatpush1.msra.mxu0 %v446
    %1226 = vmatprep.subr.mxu0 0.0
    %1227 = vmatpush2.msra.mxu0 0.0
    %1228 = vmatprep.subr.mxu0 0.0
    %1229 = vmatpush2.msra.mxu0 0.0
    %1230 = vmatprep.subr.mxu0 0.0
    %1231 = vmatpush2.msra.mxu0 0.0
    %1232 = vmatprep.subr.mxu0 0.0
    %1233 = vmatpush2.msra.mxu0 0.0
    %1234 = vmatprep.subr.mxu0 0.0
    %1235 = vmatpush2.msra.mxu0 0.0
    %1236 = vmatprep.subr.mxu0 0.0
    %1237 = vmatpush2.msra.mxu0 0.0
    %1238 = vmatprep.subr.mxu0 0.0
    %1239 = vmatpush2.msra.mxu0 0.0
    %1240 = vmatprep.subr.mxu0 0.0
    %1241 = vmatpush2.msra.mxu0 0.0
    %1242 = vmatprep.subr.mxu0 0.0
    %1243 = vmatpush2.msra.mxu0 0.0
    %1244 = vmatprep.subr.mxu0 0.0
    %1245 = vmatpush2.msra.mxu0 0.0
    %1246 = vmatprep.subr.mxu0 0.0
    %1247 = vmatpush2.msra.mxu0 0.0
    %1248 = vmatprep.subr.mxu0 0.0
    %1249 = vmatpush2.msra.mxu0 0.0
    %1250 = vmatprep.subr.mxu0 0.0
    %1251 = vmatpush2.msra.mxu0 0.0
    %1252 = vmatprep.subr.mxu0 0.0
    %1253 = vmatpush2.msra.mxu0 0.0
    %1254 = vmatprep.subr.mxu0 0.0
    %1255 = vmatpush2.msra.mxu0 0.0
    %1256 = vmatprep.subr.mxu0 0.0
    %1257 = vmatpush2.msra.mxu0 0.0
    %1258 = vmatprep.mubr.f32.mxu0 0.0
    %1259 = vmatmul.mubr.f32.gmra.mxu0 %v1186
    %v1260 = vpop.f32.mrf.mxu0
    %v1261 = vadd.f32 0.0, %v1260
    %v1262 = vpop.f32.mrf.mxu0
    %v1263 = vadd.f32 0.0, %v1262
    %1264 = vdwg.mxu0
    %1265 = vmatprep.subr.mxu0 %v509
    %1266 = vmatpush1.msra.mxu0 %v508
    %1267 = vmatprep.subr.mxu0 %v505
    %1268 = vmatpush1.msra.mxu0 %v504
    %1269 = vmatprep.subr.mxu0 %v501
    %1270 = vmatpush1.msra.mxu0 %v500
    %1271 = vmatprep.subr.mxu0 %v497
    %1272 = vmatpush1.msra.mxu0 %v496
    %1273 = vmatprep.subr.mxu0 %v493
    %1274 = vmatpush1.msra.mxu0 %v492
    %1275 = vmatprep.subr.mxu0 %v489
    %1276 = vmatpush1.msra.mxu0 %v488
    %1277 = vmatprep.subr.mxu0 %v485
    %1278 = vmatpush1.msra.mxu0 %v484
    %1279 = vmatprep.subr.mxu0 %v481
    %1280 = vmatpush1.msra.mxu0 %v480
    %1281 = vmatprep.subr.mxu0 %v477
    %1282 = vmatpush1.msra.mxu0 %v476
    %1283 = vmatprep.subr.mxu0 %v473
    %1284 = vmatpush1.msra.mxu0 %v472
    %1285 = vmatprep.subr.mxu0 %v469
    %1286 = vmatpush1.msra.mxu0 %v468
    %1287 = vmatprep.subr.mxu0 %v465
    %1288 = vmatpush1.msra.mxu0 %v464
    %1289 = vmatprep.subr.mxu0 %v461
    %1290 = vmatpush1.msra.mxu0 %v460
    %1291 = vmatprep.subr.mxu0 %v457
    %1292 = vmatpush1.msra.mxu0 %v456
    %1293 = vmatprep.subr.mxu0 %v453
    %1294 = vmatpush1.msra.mxu0 %v452
    %1295 = vmatprep.subr.mxu0 %v449
    %1296 = vmatpush1.msra.mxu0 %v448
    %1297 = vmatprep.subr.mxu0 0.0
    %1298 = vmatpush2.msra.mxu0 0.0
    %1299 = vmatprep.subr.mxu0 0.0
    %1300 = vmatpush2.msra.mxu0 0.0
    %1301 = vmatprep.subr.mxu0 0.0
    %1302 = vmatpush2.msra.mxu0 0.0
    %1303 = vmatprep.subr.mxu0 0.0
    %1304 = vmatpush2.msra.mxu0 0.0
    %1305 = vmatprep.subr.mxu0 0.0
    %1306 = vmatpush2.msra.mxu0 0.0
    %1307 = vmatprep.subr.mxu0 0.0
    %1308 = vmatpush2.msra.mxu0 0.0
    %1309 = vmatprep.subr.mxu0 0.0
    %1310 = vmatpush2.msra.mxu0 0.0
    %1311 = vmatprep.subr.mxu0 0.0
    %1312 = vmatpush2.msra.mxu0 0.0
    %1313 = vmatprep.subr.mxu0 0.0
    %1314 = vmatpush2.msra.mxu0 0.0
    %1315 = vmatprep.subr.mxu0 0.0
    %1316 = vmatpush2.msra.mxu0 0.0
    %1317 = vmatprep.subr.mxu0 0.0
    %1318 = vmatpush2.msra.mxu0 0.0
    %1319 = vmatprep.subr.mxu0 0.0
    %1320 = vmatpush2.msra.mxu0 0.0
    %1321 = vmatprep.subr.mxu0 0.0
    %1322 = vmatpush2.msra.mxu0 0.0
    %1323 = vmatprep.subr.mxu0 0.0
    %1324 = vmatpush2.msra.mxu0 0.0
    %1325 = vmatprep.subr.mxu0 0.0
    %1326 = vmatpush2.msra.mxu0 0.0
    %1327 = vmatprep.subr.mxu0 0.0
    %1328 = vmatpush2.msra.mxu0 0.0
    %1329 = vmatprep.mubr.f32.mxu0 0.0
    %1330 = vmatmul.mubr.f32.gmra.mxu0 %v1186
    %v1331 = vpop.f32.mrf.mxu0
    %v1332 = vadd.f32 0.0, %v1331
    %v1333 = vpop.f32.mrf.mxu0
    %v1334 = vadd.f32 0.0, %v1333
    %1335 = vdwg.mxu0
    %v1336 = vadd.f32 %v1190, %v1261
    %v1337 = vadd.f32 %v1191, %v1263
    %v1338 = vadd.f32 %v1192, %v1332
    %v1339 = vadd.f32 %v1193, %v1334
    %v1340 = vmul.f32 %v1336, 0.5
    %v1341 = vmul.f32 %v1337, 0.5
    %v1342 = vtanh.pop %v1340
    %v1343 = vtanh.pop %v1341
    %v1344 = vmul.f32 %v1342, 0.5
    %v1345 = vmul.f32 %v1343, 0.5
    %v1346 = vadd.f32 %v1344, 0.5
    %v1347 = vadd.f32 %v1345, 0.5
    %v1348 = vtanh.pop %v1338
    %v1349 = vmul.f32 %v1339, 0.5
    %v1350 = vtanh.pop %v1349
    %v1351 = vmul.f32 %v1350, 0.5
    %v1352 = vadd.f32 %v1351, 0.5
    %v1353 = vmul.f32 %v1347, %v1184
    %v1354 = vmul.f32 %v1346, %v1348
    %v1355 = vadd.f32 %v1353, %v1354
    %v1356 = vtanh.pop %v1355
    %v1357 = vmul.f32 %v1352, %v1356
    %s1358 = smul.u32 5, 4
    %s1359 = smul.addr %s1358, 8
    %s1360 = scalar_lea.vmem [#allocation2], %s1359
    %v1361 = vld [vmem:[%s1360] sm:$0xff]
    %v1362 = vld [vmem:[%s1360 + $0x8] sm:$0xff]
    %v1363 = vld [vmem:[%s1360 + $0x10] sm:$0xff]
    %v1364 = vld [vmem:[%s1360 + $0x18] sm:$0xff]
    %1365 = vmatprep.subr.mxu0 %v507
    %1366 = vmatpush1.msra.mxu0 %v506
    %1367 = vmatprep.subr.mxu0 %v503
    %1368 = vmatpush1.msra.mxu0 %v502
    %1369 = vmatprep.subr.mxu0 %v499
    %1370 = vmatpush1.msra.mxu0 %v498
    %1371 = vmatprep.subr.mxu0 %v495
    %1372 = vmatpush1.msra.mxu0 %v494
    %1373 = vmatprep.subr.mxu0 %v491
    %1374 = vmatpush1.msra.mxu0 %v490
    %1375 = vmatprep.subr.mxu0 %v487
    %1376 = vmatpush1.msra.mxu0 %v486
    %1377 = vmatprep.subr.mxu0 %v483
    %1378 = vmatpush1.msra.mxu0 %v482
    %1379 = vmatprep.subr.mxu0 %v479
    %1380 = vmatpush1.msra.mxu0 %v478
    %1381 = vmatprep.subr.mxu0 %v475
    %1382 = vmatpush1.msra.mxu0 %v474
    %1383 = vmatprep.subr.mxu0 %v471
    %1384 = vmatpush1.msra.mxu0 %v470
    %1385 = vmatprep.subr.mxu0 %v467
    %1386 = vmatpush1.msra.mxu0 %v466
    %1387 = vmatprep.subr.mxu0 %v463
    %1388 = vmatpush1.msra.mxu0 %v462
    %1389 = vmatprep.subr.mxu0 %v459
    %1390 = vmatpush1.msra.mxu0 %v458
    %1391 = vmatprep.subr.mxu0 %v455
    %1392 = vmatpush1.msra.mxu0 %v454
    %1393 = vmatprep.subr.mxu0 %v451
    %1394 = vmatpush1.msra.mxu0 %v450
    %1395 = vmatprep.subr.mxu0 %v447
    %1396 = vmatpush1.msra.mxu0 %v446
    %1397 = vmatprep.subr.mxu0 0.0
    %1398 = vmatpush2.msra.mxu0 0.0
    %1399 = vmatprep.subr.mxu0 0.0
    %1400 = vmatpush2.msra.mxu0 0.0
    %1401 = vmatprep.subr.mxu0 0.0
    %1402 = vmatpush2.msra.mxu0 0.0
    %1403 = vmatprep.subr.mxu0 0.0
    %1404 = vmatpush2.msra.mxu0 0.0
    %1405 = vmatprep.subr.mxu0 0.0
    %1406 = vmatpush2.msra.mxu0 0.0
    %1407 = vmatprep.subr.mxu0 0.0
    %1408 = vmatpush2.msra.mxu0 0.0
    %1409 = vmatprep.subr.mxu0 0.0
    %1410 = vmatpush2.msra.mxu0 0.0
    %1411 = vmatprep.subr.mxu0 0.0
    %1412 = vmatpush2.msra.mxu0 0.0
    %1413 = vmatprep.subr.mxu0 0.0
    %1414 = vmatpush2.msra.mxu0 0.0
    %1415 = vmatprep.subr.mxu0 0.0
    %1416 = vmatpush2.msra.mxu0 0.0
    %1417 = vmatprep.subr.mxu0 0.0
    %1418 = vmatpush2.msra.mxu0 0.0
    %1419 = vmatprep.subr.mxu0 0.0
    %1420 = vmatpush2.msra.mxu0 0.0
    %1421 = vmatprep.subr.mxu0 0.0
    %1422 = vmatpush2.msra.mxu0 0.0
    %1423 = vmatprep.subr.mxu0 0.0
    %1424 = vmatpush2.msra.mxu0 0.0
    %1425 = vmatprep.subr.mxu0 0.0
    %1426 = vmatpush2.msra.mxu0 0.0
    %1427 = vmatprep.subr.mxu0 0.0
    %1428 = vmatpush2.msra.mxu0 0.0
    %1429 = vmatprep.mubr.f32.mxu0 0.0
    %1430 = vmatmul.mubr.f32.gmra.mxu0 %v1357
    %v1431 = vpop.f32.mrf.mxu0
    %v1432 = vadd.f32 0.0, %v1431
    %v1433 = vpop.f32.mrf.mxu0
    %v1434 = vadd.f32 0.0, %v1433
    %1435 = vdwg.mxu0
    %1436 = vmatprep.subr.mxu0 %v509
    %1437 = vmatpush1.msra.mxu0 %v508
    %1438 = vmatprep.subr.mxu0 %v505
    %1439 = vmatpush1.msra.mxu0 %v504
    %1440 = vmatprep.subr.mxu0 %v501
    %1441 = vmatpush1.msra.mxu0 %v500
    %1442 = vmatprep.subr.mxu0 %v497
    %1443 = vmatpush1.msra.mxu0 %v496
    %1444 = vmatprep.subr.mxu0 %v493
    %1445 = vmatpush1.msra.mxu0 %v492
    %1446 = vmatprep.subr.mxu0 %v489
    %1447 = vmatpush1.msra.mxu0 %v488
    %1448 = vmatprep.subr.mxu0 %v485
    %1449 = vmatpush1.msra.mxu0 %v484
    %1450 = vmatprep.subr.mxu0 %v481
    %1451 = vmatpush1.msra.mxu0 %v480
    %1452 = vmatprep.subr.mxu0 %v477
    %1453 = vmatpush1.msra.mxu0 %v476
    %1454 = vmatprep.subr.mxu0 %v473
    %1455 = vmatpush1.msra.mxu0 %v472
    %1456 = vmatprep.subr.mxu0 %v469
    %1457 = vmatpush1.msra.mxu0 %v468
    %1458 = vmatprep.subr.mxu0 %v465
    %1459 = vmatpush1.msra.mxu0 %v464
    %1460 = vmatprep.subr.mxu0 %v461
    %1461 = vmatpush1.msra.mxu0 %v460
    %1462 = vmatprep.subr.mxu0 %v457
    %1463 = vmatpush1.msra.mxu0 %v456
    %1464 = vmatprep.subr.mxu0 %v453
    %1465 = vmatpush1.msra.mxu0 %v452
    %1466 = vmatprep.subr.mxu0 %v449
    %1467 = vmatpush1.msra.mxu0 %v448
    %1468 = vmatprep.subr.mxu0 0.0
    %1469 = vmatpush2.msra.mxu0 0.0
    %1470 = vmatprep.subr.mxu0 0.0
    %1471 = vmatpush2.msra.mxu0 0.0
    %1472 = vmatprep.subr.mxu0 0.0
    %1473 = vmatpush2.msra.mxu0 0.0
    %1474 = vmatprep.subr.mxu0 0.0
    %1475 = vmatpush2.msra.mxu0 0.0
    %1476 = vmatprep.subr.mxu0 0.0
    %1477 = vmatpush2.msra.mxu0 0.0
    %1478 = vmatprep.subr.mxu0 0.0
    %1479 = vmatpush2.msra.mxu0 0.0
    %1480 = vmatprep.subr.mxu0 0.0
    %1481 = vmatpush2.msra.mxu0 0.0
    %1482 = vmatprep.subr.mxu0 0.0
    %1483 = vmatpush2.msra.mxu0 0.0
    %1484 = vmatprep.subr.mxu0 0.0
    %1485 = vmatpush2.msra.mxu0 0.0
    %1486 = vmatprep.subr.mxu0 0.0
    %1487 = vmatpush2.msra.mxu0 0.0
    %1488 = vmatprep.subr.mxu0 0.0
    %1489 = vmatpush2.msra.mxu0 0.0
    %1490 = vmatprep.subr.mxu0 0.0
    %1491 = vmatpush2.msra.mxu0 0.0
    %1492 = vmatprep.subr.mxu0 0.0
    %1493 = vmatpush2.msra.mxu0 0.0
    %1494 = vmatprep.subr.mxu0 0.0
    %1495 = vmatpush2.msra.mxu0 0.0
    %1496 = vmatprep.subr.mxu0 0.0
    %1497 = vmatpush2.msra.mxu0 0.0
    %1498 = vmatprep.subr.mxu0 0.0
    %1499 = vmatpush2.msra.mxu0 0.0
    %1500 = vmatprep.mubr.f32.mxu0 0.0
    %1501 = vmatmul.mubr.f32.gmra.mxu0 %v1357
    %v1502 = vpop.f32.mrf.mxu0
    %v1503 = vadd.f32 0.0, %v1502
    %v1504 = vpop.f32.mrf.mxu0
    %v1505 = vadd.f32 0.0, %v1504
    %1506 = vdwg.mxu0
    %v1507 = vadd.f32 %v1361, %v1432
    %v1508 = vadd.f32 %v1362, %v1434
    %v1509 = vadd.f32 %v1363, %v1503
    %v1510 = vadd.f32 %v1364, %v1505
    %v1511 = vmul.f32 %v1507, 0.5
    %v1512 = vmul.f32 %v1508, 0.5
    %v1513 = vtanh.pop %v1511
    %v1514 = vtanh.pop %v1512
    %v1515 = vmul.f32 %v1513, 0.5
    %v1516 = vmul.f32 %v1514, 0.5
    %v1517 = vadd.f32 %v1515, 0.5
    %v1518 = vadd.f32 %v1516, 0.5
    %v1519 = vtanh.pop %v1509
    %v1520 = vmul.f32 %v1510, 0.5
    %v1521 = vtanh.pop %v1520
    %v1522 = vmul.f32 %v1521, 0.5
    %v1523 = vadd.f32 %v1522, 0.5
    %v1524 = vmul.f32 %v1518, %v1355
    %v1525 = vmul.f32 %v1517, %v1519
    %v1526 = vadd.f32 %v1524, %v1525
    %v1527 = vtanh.pop %v1526
    %v1528 = vmul.f32 %v1523, %v1527
    %s1529 = smul.u32 6, 4
    %s1530 = smul.addr %s1529, 8
    %s1531 = scalar_lea.vmem [#allocation2], %s1530
    %v1532 = vld [vmem:[%s1531] sm:$0xff]
    %v1533 = vld [vmem:[%s1531 + $0x8] sm:$0xff]
    %v1534 = vld [vmem:[%s1531 + $0x10] sm:$0xff]
    %v1535 = vld [vmem:[%s1531 + $0x18] sm:$0xff]
    %1536 = vmatprep.subr.mxu0 %v507
    %1537 = vmatpush1.msra.mxu0 %v506
    %1538 = vmatprep.subr.mxu0 %v503
    %1539 = vmatpush1.msra.mxu0 %v502
    %1540 = vmatprep.subr.mxu0 %v499
    %1541 = vmatpush1.msra.mxu0 %v498
    %1542 = vmatprep.subr.mxu0 %v495
    %1543 = vmatpush1.msra.mxu0 %v494
    %1544 = vmatprep.subr.mxu0 %v491
    %1545 = vmatpush1.msra.mxu0 %v490
    %1546 = vmatprep.subr.mxu0 %v487
    %1547 = vmatpush1.msra.mxu0 %v486
    %1548 = vmatprep.subr.mxu0 %v483
    %1549 = vmatpush1.msra.mxu0 %v482
    %1550 = vmatprep.subr.mxu0 %v479
    %1551 = vmatpush1.msra.mxu0 %v478
    %1552 = vmatprep.subr.mxu0 %v475
    %1553 = vmatpush1.msra.mxu0 %v474
    %1554 = vmatprep.subr.mxu0 %v471
    %1555 = vmatpush1.msra.mxu0 %v470
    %1556 = vmatprep.subr.mxu0 %v467
    %1557 = vmatpush1.msra.mxu0 %v466
    %1558 = vmatprep.subr.mxu0 %v463
    %1559 = vmatpush1.msra.mxu0 %v462
    %1560 = vmatprep.subr.mxu0 %v459
    %1561 = vmatpush1.msra.mxu0 %v458
    %1562 = vmatprep.subr.mxu0 %v455
    %1563 = vmatpush1.msra.mxu0 %v454
    %1564 = vmatprep.subr.mxu0 %v451
    %1565 = vmatpush1.msra.mxu0 %v450
    %1566 = vmatprep.subr.mxu0 %v447
    %1567 = vmatpush1.msra.mxu0 %v446
    %1568 = vmatprep.subr.mxu0 0.0
    %1569 = vmatpush2.msra.mxu0 0.0
    %1570 = vmatprep.subr.mxu0 0.0
    %1571 = vmatpush2.msra.mxu0 0.0
    %1572 = vmatprep.subr.mxu0 0.0
    %1573 = vmatpush2.msra.mxu0 0.0
    %1574 = vmatprep.subr.mxu0 0.0
    %1575 = vmatpush2.msra.mxu0 0.0
    %1576 = vmatprep.subr.mxu0 0.0
    %1577 = vmatpush2.msra.mxu0 0.0
    %1578 = vmatprep.subr.mxu0 0.0
    %1579 = vmatpush2.msra.mxu0 0.0
    %1580 = vmatprep.subr.mxu0 0.0
    %1581 = vmatpush2.msra.mxu0 0.0
    %1582 = vmatprep.subr.mxu0 0.0
    %1583 = vmatpush2.msra.mxu0 0.0
    %1584 = vmatprep.subr.mxu0 0.0
    %1585 = vmatpush2.msra.mxu0 0.0
    %1586 = vmatprep.subr.mxu0 0.0
    %1587 = vmatpush2.msra.mxu0 0.0
    %1588 = vmatprep.subr.mxu0 0.0
    %1589 = vmatpush2.msra.mxu0 0.0
    %1590 = vmatprep.subr.mxu0 0.0
    %1591 = vmatpush2.msra.mxu0 0.0
    %1592 = vmatprep.subr.mxu0 0.0
    %1593 = vmatpush2.msra.mxu0 0.0
    %1594 = vmatprep.subr.mxu0 0.0
    %1595 = vmatpush2.msra.mxu0 0.0
    %1596 = vmatprep.subr.mxu0 0.0
    %1597 = vmatpush2.msra.mxu0 0.0
    %1598 = vmatprep.subr.mxu0 0.0
    %1599 = vmatpush2.msra.mxu0 0.0
    %1600 = vmatprep.mubr.f32.mxu0 0.0
    %1601 = vmatmul.mubr.f32.gmra.mxu0 %v1528
    %v1602 = vpop.f32.mrf.mxu0
    %v1603 = vadd.f32 0.0, %v1602
    %v1604 = vpop.f32.mrf.mxu0
    %v1605 = vadd.f32 0.0, %v1604
    %1606 = vdwg.mxu0
    %1607 = vmatprep.subr.mxu0 %v509
    %1608 = vmatpush1.msra.mxu0 %v508
    %1609 = vmatprep.subr.mxu0 %v505
    %1610 = vmatpush1.msra.mxu0 %v504
    %1611 = vmatprep.subr.mxu0 %v501
    %1612 = vmatpush1.msra.mxu0 %v500
    %1613 = vmatprep.subr.mxu0 %v497
    %1614 = vmatpush1.msra.mxu0 %v496
    %1615 = vmatprep.subr.mxu0 %v493
    %1616 = vmatpush1.msra.mxu0 %v492
    %1617 = vmatprep.subr.mxu0 %v489
    %1618 = vmatpush1.msra.mxu0 %v488
    %1619 = vmatprep.subr.mxu0 %v485
    %1620 = vmatpush1.msra.mxu0 %v484
    %1621 = vmatprep.subr.mxu0 %v481
    %1622 = vmatpush1.msra.mxu0 %v480
    %1623 = vmatprep.subr.mxu0 %v477
    %1624 = vmatpush1.msra.mxu0 %v476
    %1625 = vmatprep.subr.mxu0 %v473
    %1626 = vmatpush1.msra.mxu0 %v472
    %1627 = vmatprep.subr.mxu0 %v469
    %1628 = vmatpush1.msra.mxu0 %v468
    %1629 = vmatprep.subr.mxu0 %v465
    %1630 = vmatpush1.msra.mxu0 %v464
    %1631 = vmatprep.subr.mxu0 %v461
    %1632 = vmatpush1.msra.mxu0 %v460
    %1633 = vmatprep.subr.mxu0 %v457
    %1634 = vmatpush1.msra.mxu0 %v456
    %1635 = vmatprep.subr.mxu0 %v453
    %1636 = vmatpush1.msra.mxu0 %v452
    %1637 = vmatprep.subr.mxu0 %v449
    %1638 = vmatpush1.msra.mxu0 %v448
    %1639 = vmatprep.subr.mxu0 0.0
    %1640 = vmatpush2.msra.mxu0 0.0
    %1641 = vmatprep.subr.mxu0 0.0
    %1642 = vmatpush2.msra.mxu0 0.0
    %1643 = vmatprep.subr.mxu0 0.0
    %1644 = vmatpush2.msra.mxu0 0.0
    %1645 = vmatprep.subr.mxu0 0.0
    %1646 = vmatpush2.msra.mxu0 0.0
    %1647 = vmatprep.subr.mxu0 0.0
    %1648 = vmatpush2.msra.mxu0 0.0
    %1649 = vmatprep.subr.mxu0 0.0
    %1650 = vmatpush2.msra.mxu0 0.0
    %1651 = vmatprep.subr.mxu0 0.0
    %1652 = vmatpush2.msra.mxu0 0.0
    %1653 = vmatprep.subr.mxu0 0.0
    %1654 = vmatpush2.msra.mxu0 0.0
    %1655 = vmatprep.subr.mxu0 0.0
    %1656 = vmatpush2.msra.mxu0 0.0
    %1657 = vmatprep.subr.mxu0 0.0
    %1658 = vmatpush2.msra.mxu0 0.0
    %1659 = vmatprep.subr.mxu0 0.0
    %1660 = vmatpush2.msra.mxu0 0.0
    %1661 = vmatprep.subr.mxu0 0.0
    %1662 = vmatpush2.msra.mxu0 0.0
    %1663 = vmatprep.subr.mxu0 0.0
    %1664 = vmatpush2.msra.mxu0 0.0
    %1665 = vmatprep.subr.mxu0 0.0
    %1666 = vmatpush2.msra.mxu0 0.0
    %1667 = vmatprep.subr.mxu0 0.0
    %1668 = vmatpush2.msra.mxu0 0.0
    %1669 = vmatprep.subr.mxu0 0.0
    %1670 = vmatpush2.msra.mxu0 0.0
    %1671 = vmatprep.mubr.f32.mxu0 0.0
    %1672 = vmatmul.mubr.f32.gmra.mxu0 %v1528
    %v1673 = vpop.f32.mrf.mxu0
    %v1674 = vadd.f32 0.0, %v1673
    %v1675 = vpop.f32.mrf.mxu0
    %v1676 = vadd.f32 0.0, %v1675
    %1677 = vdwg.mxu0
    %v1678 = vadd.f32 %v1532, %v1603
    %v1679 = vadd.f32 %v1533, %v1605
    %v1680 = vadd.f32 %v1534, %v1674
    %v1681 = vadd.f32 %v1535, %v1676
    %v1682 = vmul.f32 %v1678, 0.5
    %v1683 = vmul.f32 %v1679, 0.5
    %v1684 = vtanh.pop %v1682
    %v1685 = vtanh.pop %v1683
    %v1686 = vmul.f32 %v1684, 0.5
    %v1687 = vmul.f32 %v1685, 0.5
    %v1688 = vadd.f32 %v1686, 0.5
    %v1689 = vadd.f32 %v1687, 0.5
    %v1690 = vtanh.pop %v1680
    %v1691 = vmul.f32 %v1681, 0.5
    %v1692 = vtanh.pop %v1691
    %v1693 = vmul.f32 %v1692, 0.5
    %v1694 = vadd.f32 %v1693, 0.5
    %v1695 = vmul.f32 %v1689, %v1526
    %v1696 = vmul.f32 %v1688, %v1690
    %v1697 = vadd.f32 %v1695, %v1696
    %v1698 = vtanh.pop %v1697
    %v1699 = vmul.f32 %v1694, %v1698
    %s1700 = smul.u32 7, 4
    %s1701 = smul.addr %s1700, 8
    %s1702 = scalar_lea.vmem [#allocation2], %s1701
    %v1703 = vld [vmem:[%s1702] sm:$0xff]
    %v1704 = vld [vmem:[%s1702 + $0x8] sm:$0xff]
    %v1705 = vld [vmem:[%s1702 + $0x10] sm:$0xff]
    %v1706 = vld [vmem:[%s1702 + $0x18] sm:$0xff]
    %1707 = vmatprep.subr.mxu0 %v507
    %1708 = vmatpush1.msra.mxu0 %v506
    %1709 = vmatprep.subr.mxu0 %v503
    %1710 = vmatpush1.msra.mxu0 %v502
    %1711 = vmatprep.subr.mxu0 %v499
    %1712 = vmatpush1.msra.mxu0 %v498
    %1713 = vmatprep.subr.mxu0 %v495
    %1714 = vmatpush1.msra.mxu0 %v494
    %1715 = vmatprep.subr.mxu0 %v491
    %1716 = vmatpush1.msra.mxu0 %v490
    %1717 = vmatprep.subr.mxu0 %v487
    %1718 = vmatpush1.msra.mxu0 %v486
    %1719 = vmatprep.subr.mxu0 %v483
    %1720 = vmatpush1.msra.mxu0 %v482
    %1721 = vmatprep.subr.mxu0 %v479
    %1722 = vmatpush1.msra.mxu0 %v478
    %1723 = vmatprep.subr.mxu0 %v475
    %1724 = vmatpush1.msra.mxu0 %v474
    %1725 = vmatprep.subr.mxu0 %v471
    %1726 = vmatpush1.msra.mxu0 %v470
    %1727 = vmatprep.subr.mxu0 %v467
    %1728 = vmatpush1.msra.mxu0 %v466
    %1729 = vmatprep.subr.mxu0 %v463
    %1730 = vmatpush1.msra.mxu0 %v462
    %1731 = vmatprep.subr.mxu0 %v459
    %1732 = vmatpush1.msra.mxu0 %v458
    %1733 = vmatprep.subr.mxu0 %v455
    %1734 = vmatpush1.msra.mxu0 %v454
    %1735 = vmatprep.subr.mxu0 %v451
    %1736 = vmatpush1.msra.mxu0 %v450
    %1737 = vmatprep.subr.mxu0 %v447
    %1738 = vmatpush1.msra.mxu0 %v446
    %1739 = vmatprep.subr.mxu0 0.0
    %1740 = vmatpush2.msra.mxu0 0.0
    %1741 = vmatprep.subr.mxu0 0.0
    %1742 = vmatpush2.msra.mxu0 0.0
    %1743 = vmatprep.subr.mxu0 0.0
    %1744 = vmatpush2.msra.mxu0 0.0
    %1745 = vmatprep.subr.mxu0 0.0
    %1746 = vmatpush2.msra.mxu0 0.0
    %1747 = vmatprep.subr.mxu0 0.0
    %1748 = vmatpush2.msra.mxu0 0.0
    %1749 = vmatprep.subr.mxu0 0.0
    %1750 = vmatpush2.msra.mxu0 0.0
    %1751 = vmatprep.subr.mxu0 0.0
    %1752 = vmatpush2.msra.mxu0 0.0
    %1753 = vmatprep.subr.mxu0 0.0
    %1754 = vmatpush2.msra.mxu0 0.0
    %1755 = vmatprep.subr.mxu0 0.0
    %1756 = vmatpush2.msra.mxu0 0.0
    %1757 = vmatprep.subr.mxu0 0.0
    %1758 = vmatpush2.msra.mxu0 0.0
    %1759 = vmatprep.subr.mxu0 0.0
    %1760 = vmatpush2.msra.mxu0 0.0
    %1761 = vmatprep.subr.mxu0 0.0
    %1762 = vmatpush2.msra.mxu0 0.0
    %1763 = vmatprep.subr.mxu0 0.0
    %1764 = vmatpush2.msra.mxu0 0.0
    %1765 = vmatprep.subr.mxu0 0.0
    %1766 = vmatpush2.msra.mxu0 0.0
    %1767 = vmatprep.subr.mxu0 0.0
    %1768 = vmatpush2.msra.mxu0 0.0
    %1769 = vmatprep.subr.mxu0 0.0
    %1770 = vmatpush2.msra.mxu0 0.0
    %1771 = vmatprep.mubr.f32.mxu0 0.0
    %1772 = vmatmul.mubr.f32.gmra.mxu0 %v1699
    %v1773 = vpop.f32.mrf.mxu0
    %v1774 = vadd.f32 0.0, %v1773
    %v1775 = vpop.f32.mrf.mxu0
    %v1776 = vadd.f32 0.0, %v1775
    %1777 = vdwg.mxu0
    %1778 = vmatprep.subr.mxu0 %v509
    %1779 = vmatpush1.msra.mxu0 %v508
    %1780 = vmatprep.subr.mxu0 %v505
    %1781 = vmatpush1.msra.mxu0 %v504
    %1782 = vmatprep.subr.mxu0 %v501
    %1783 = vmatpush1.msra.mxu0 %v500
    %1784 = vmatprep.subr.mxu0 %v497
    %1785 = vmatpush1.msra.mxu0 %v496
    %1786 = vmatprep.subr.mxu0 %v493
    %1787 = vmatpush1.msra.mxu0 %v492
    %1788 = vmatprep.subr.mxu0 %v489
    %1789 = vmatpush1.msra.mxu0 %v488
    %1790 = vmatprep.subr.mxu0 %v485
    %1791 = vmatpush1.msra.mxu0 %v484
    %1792 = vmatprep.subr.mxu0 %v481
    %1793 = vmatpush1.msra.mxu0 %v480
    %1794 = vmatprep.subr.mxu0 %v477
    %1795 = vmatpush1.msra.mxu0 %v476
    %1796 = vmatprep.subr.mxu0 %v473
    %1797 = vmatpush1.msra.mxu0 %v472
    %1798 = vmatprep.subr.mxu0 %v469
    %1799 = vmatpush1.msra.mxu0 %v468
    %1800 = vmatprep.subr.mxu0 %v465
    %1801 = vmatpush1.msra.mxu0 %v464
    %1802 = vmatprep.subr.mxu0 %v461
    %1803 = vmatpush1.msra.mxu0 %v460
    %1804 = vmatprep.subr.mxu0 %v457
    %1805 = vmatpush1.msra.mxu0 %v456
    %1806 = vmatprep.subr.mxu0 %v453
    %1807 = vmatpush1.msra.mxu0 %v452
    %1808 = vmatprep.subr.mxu0 %v449
    %1809 = vmatpush1.msra.mxu0 %v448
    %1810 = vmatprep.subr.mxu0 0.0
    %1811 = vmatpush2.msra.mxu0 0.0
    %1812 = vmatprep.subr.mxu0 0.0
    %1813 = vmatpush2.msra.mxu0 0.0
    %1814 = vmatprep.subr.mxu0 0.0
    %1815 = vmatpush2.msra.mxu0 0.0
    %1816 = vmatprep.subr.mxu0 0.0
    %1817 = vmatpush2.msra.mxu0 0.0
    %1818 = vmatprep.subr.mxu0 0.0
    %1819 = vmatpush2.msra.mxu0 0.0
    %1820 = vmatprep.subr.mxu0 0.0
    %1821 = vmatpush2.msra.mxu0 0.0
    %1822 = vmatprep.subr.mxu0 0.0
    %1823 = vmatpush2.msra.mxu0 0.0
    %1824 = vmatprep.subr.mxu0 0.0
    %1825 = vmatpush2.msra.mxu0 0.0
    %1826 = vmatprep.subr.mxu0 0.0
    %1827 = vmatpush2.msra.mxu0 0.0
    %1828 = vmatprep.subr.mxu0 0.0
    %1829 = vmatpush2.msra.mxu0 0.0
    %1830 = vmatprep.subr.mxu0 0.0
    %1831 = vmatpush2.msra.mxu0 0.0
    %1832 = vmatprep.subr.mxu0 0.0
    %1833 = vmatpush2.msra.mxu0 0.0
    %1834 = vmatprep.subr.mxu0 0.0
    %1835 = vmatpush2.msra.mxu0 0.0
    %1836 = vmatprep.subr.mxu0 0.0
    %1837 = vmatpush2.msra.mxu0 0.0
    %1838 = vmatprep.subr.mxu0 0.0
    %1839 = vmatpush2.msra.mxu0 0.0
    %1840 = vmatprep.subr.mxu0 0.0
    %1841 = vmatpush2.msra.mxu0 0.0
    %1842 = vmatprep.mubr.f32.mxu0 0.0
    %1843 = vmatmul.mubr.f32.gmra.mxu0 %v1699
    %v1844 = vpop.f32.mrf.mxu0
    %v1845 = vadd.f32 0.0, %v1844
    %v1846 = vpop.f32.mrf.mxu0
    %v1847 = vadd.f32 0.0, %v1846
    %1848 = vdwg.mxu0
    %v1849 = vadd.f32 %v1703, %v1774
    %v1850 = vadd.f32 %v1704, %v1776
    %v1851 = vadd.f32 %v1705, %v1845
    %v1852 = vadd.f32 %v1706, %v1847
    %v1853 = vmul.f32 %v1849, 0.5
    %v1854 = vmul.f32 %v1850, 0.5
    %v1855 = vtanh.pop %v1853
    %v1856 = vtanh.pop %v1854
    %v1857 = vmul.f32 %v1855, 0.5
    %v1858 = vmul.f32 %v1856, 0.5
    %v1859 = vadd.f32 %v1857, 0.5
    %v1860 = vadd.f32 %v1858, 0.5
    %v1861 = vtanh.pop %v1851
    %v1862 = vmul.f32 %v1852, 0.5
    %v1863 = vtanh.pop %v1862
    %v1864 = vmul.f32 %v1863, 0.5
    %v1865 = vadd.f32 %v1864, 0.5
    %v1866 = vmul.f32 %v1860, %v1697
    %v1867 = vmul.f32 %v1859, %v1861
    %v1868 = vadd.f32 %v1866, %v1867
    %v1869 = vtanh.pop %v1868
    %v1870 = vmul.f32 %v1865, %v1869
    %1871 = vst [vmem:[#allocation3] sm:$0xff] %v1870
    %1872 = vst [vmem:[#allocation4] sm:$0xff] %v1868
    // Predicated region
    $region46: #{tpu_custom_call.1} parent=1 // pred_check
      %p1873 = pneg %p79
    $region47: #{tpu_custom_call.1} parent=1 // pred_check_branch
      %1875 = sbr.rel (%p1873) target = $region49
    $region48: #{tpu_custom_call.1} parent=1 // pred_region
      %v1876 = vld [vmem:[#allocation11] sm:$0xff]
      %v1877 = vld [vmem:[#allocation11 + $0x8] sm:$0xff]
      %v1878 = vld [vmem:[#allocation11 + $0x10] sm:$0xff]
      %v1879 = vld [vmem:[#allocation11 + $0x18] sm:$0xff]
      %v1880 = vld [vmem:[#allocation11 + $0x20] sm:$0xff]
      %v1881 = vld [vmem:[#allocation11 + $0x28] sm:$0xff]
      %v1882 = vld [vmem:[#allocation11 + $0x30] sm:$0xff]
      %v1883 = vld [vmem:[#allocation11 + $0x38] sm:$0xff]
      %v1884 = vld [vmem:[#allocation11 + $0x40] sm:$0xff]
      %v1885 = vld [vmem:[#allocation11 + $0x48] sm:$0xff]
      %v1886 = vld [vmem:[#allocation11 + $0x50] sm:$0xff]
      %v1887 = vld [vmem:[#allocation11 + $0x58] sm:$0xff]
      %v1888 = vld [vmem:[#allocation11 + $0x60] sm:$0xff]
      %v1889 = vld [vmem:[#allocation11 + $0x68] sm:$0xff]
      %v1890 = vld [vmem:[#allocation11 + $0x70] sm:$0xff]
      %v1891 = vld [vmem:[#allocation11 + $0x78] sm:$0xff]
      %v1892 = vld [vmem:[%s5] sm:$0x1]
      %v1894 = vlaneseq
      %v1895 = vshrl.u32 %v1894, 7
      %v1896 = vsub.s32 0, %v1895
      %v1897 = vrot.slane %v1892, %v1896
      %1899 = vmatprep.subr.mxu0 0.0
      %1900 = vmatpush1.msra.mxu0 %v1891
      %1901 = vmatprep.subr.mxu0 0.0
      %1902 = vmatpush1.msra.mxu0 %v1890
      %1903 = vmatprep.subr.mxu0 0.0
      %1904 = vmatpush1.msra.mxu0 %v1889
      %1905 = vmatprep.subr.mxu0 0.0
      %1906 = vmatpush1.msra.mxu0 %v1888
      %1907 = vmatprep.subr.mxu0 0.0
      %1908 = vmatpush1.msra.mxu0 %v1887
      %1909 = vmatprep.subr.mxu0 0.0
      %1910 = vmatpush1.msra.mxu0 %v1886
      %1911 = vmatprep.subr.mxu0 0.0
      %1912 = vmatpush1.msra.mxu0 %v1885
      %1913 = vmatprep.subr.mxu0 0.0
      %1914 = vmatpush1.msra.mxu0 %v1884
      %1915 = vmatprep.subr.mxu0 0.0
      %1916 = vmatpush1.msra.mxu0 %v1883
      %1917 = vmatprep.subr.mxu0 0.0
      %1918 = vmatpush1.msra.mxu0 %v1882
      %1919 = vmatprep.subr.mxu0 0.0
      %1920 = vmatpush1.msra.mxu0 %v1881
      %1921 = vmatprep.subr.mxu0 0.0
      %1922 = vmatpush1.msra.mxu0 %v1880
      %1923 = vmatprep.subr.mxu0 0.0
      %1924 = vmatpush1.msra.mxu0 %v1879
      %1925 = vmatprep.subr.mxu0 0.0
      %1926 = vmatpush1.msra.mxu0 %v1878
      %1927 = vmatprep.subr.mxu0 0.0
      %1928 = vmatpush1.msra.mxu0 %v1877
      %1929 = vmatprep.subr.mxu0 0.0
      %1930 = vmatpush1.msra.mxu0 %v1876
      %1931 = vmatprep.subr.mxu0 0.0
      %1932 = vmatpush2.msra.mxu0 0.0
      %1933 = vmatprep.subr.mxu0 0.0
      %1934 = vmatpush2.msra.mxu0 0.0
      %1935 = vmatprep.subr.mxu0 0.0
      %1936 = vmatpush2.msra.mxu0 0.0
      %1937 = vmatprep.subr.mxu0 0.0
      %1938 = vmatpush2.msra.mxu0 0.0
      %1939 = vmatprep.subr.mxu0 0.0
      %1940 = vmatpush2.msra.mxu0 0.0
      %1941 = vmatprep.subr.mxu0 0.0
      %1942 = vmatpush2.msra.mxu0 0.0
      %1943 = vmatprep.subr.mxu0 0.0
      %1944 = vmatpush2.msra.mxu0 0.0
      %1945 = vmatprep.subr.mxu0 0.0
      %1946 = vmatpush2.msra.mxu0 0.0
      %1947 = vmatprep.subr.mxu0 0.0
      %1948 = vmatpush2.msra.mxu0 0.0
      %1949 = vmatprep.subr.mxu0 0.0
      %1950 = vmatpush2.msra.mxu0 0.0
      %1951 = vmatprep.subr.mxu0 0.0
      %1952 = vmatpush2.msra.mxu0 0.0
      %1953 = vmatprep.subr.mxu0 0.0
      %1954 = vmatpush2.msra.mxu0 0.0
      %1955 = vmatprep.subr.mxu0 0.0
      %1956 = vmatpush2.msra.mxu0 0.0
      %1957 = vmatprep.subr.mxu0 0.0
      %1958 = vmatpush2.msra.mxu0 0.0
      %1959 = vmatprep.subr.mxu0 0.0
      %1960 = vmatpush2.msra.mxu0 0.0
      %1961 = vmatprep.subr.mxu0 0.0
      %1962 = vmatpush2.msra.mxu0 0.0
      %1963 = vmatprep.mubr.f32.mxu0 0.0
      %1964 = vmatmul.mubr.f32.gmra.mxu0 %v1870
      %v1965 = vpop.f32.mrf.mxu0
      %v1966 = vadd.f32 %v1897, %v1965
      %v1967 = vpop.f32.mrf.mxu0
      %1968 = vdwg.mxu0
      %1969 = vst [vmem:[#allocation13] sm:$0xff] %v1966
    $region49: #{tpu_custom_call.1} parent=1 // pred_fallthru
      _
    // Predicated region
    $region50: #{tpu_custom_call.1} parent=1 // pred_check
      _
    $region51: #{tpu_custom_call.1} parent=1 // pred_check_branch
      %1971 = sbr.rel (0) target = $region53
    $region52: #{tpu_custom_call.1} parent=1 // pred_region
      %s1973 = ssub.s32 128, 128
      %1974 = vsyncadd [#allocation7], %s1973
      %s1976 = sshll.u32 [#allocation13], 4
      %s1977 = int_to_ptr.vmem [resolvable:$true] %s1976
      %1979 = dma.vmem_to_hbm [thread:$0]  %s1977, 128, %s6, [#allocation7]
    $region53: #{tpu_custom_call.1} parent=1 // pred_fallthru
      _
    // Predicated region
    $region54: #{tpu_custom_call.1} parent=1 // pred_check
      _
    $region55: #{tpu_custom_call.1} parent=1 // pred_check_branch
      %1981 = sbr.rel (0) target = $region57
    $region56: #{tpu_custom_call.1} parent=1 // pred_region
      %1982 = dma.done [#allocation7], 128
    $region57: #{tpu_custom_call.1} parent=1 // pred_fallthru
      _
    %1983 = vsyncpa [#allocation6], 1
    %1984 = vsyncpa [#allocation9], 1
    %1985 = vsyncpa [#allocation12], 1
    %1986 = vsyncpa [#allocation7], 1

</llo_original>
